<compile_context>
chip_gen: v6e
topology: v6e:2x2x1
jax: 0.10.0
libtpu: 0.0.40
codegen_flags: <defaults>
</compile_context>

<pallas_src>
import functools

import jax
import jax.numpy as jnp
from jax import lax
from jax.experimental import pallas as pl
from jax.experimental.pallas import tpu as pltpu


def _round_up(x, m):
    return ((x + m - 1) // m) * m


def _mxu_row_cap():
    """MXU LHS row depth per generation: 128 (v4/v5) or 256 (v6e/v7x)."""
    try:
        kind = jax.devices()[0].device_kind.lower()
    except Exception:
        return 128
    return 256 if ("v6" in kind or "v7" in kind or "7x" in kind) else 128


def _default_block_n(n):
    """Fill MXU rows; prefer >=2 grid steps (v7x megacore) if tiles stay >=128."""
    cap = _mxu_row_cap()
    half = _round_up(pl.cdiv(n, 2), 8)
    if half >= 128:
        return min(cap, half)
    return min(cap, _round_up(n, 8))


def _fc2l_kernel(ids_ref, emb_hi_ref, emb_lo_ref, w2_hi_ref, w2_lo_ref, b2_ref,
                 out_ref):
    nb, utt_len = ids_ref.shape          # batch tile (sublanes), positions
    table_rows = emb_hi_ref.shape[0]     # R = M * (V+1)

    dot = functools.partial(jnp.dot, preferred_element_type=jnp.float32)

    # Multi-hot selector over the full R-lane id range.  Each position's hit
    # lands in its own disjoint (V+1)-lane slice, so OR-accumulating the M
    # compares gives an exact 0/1 row; bf16 represents 0/1 exactly.
    ids = ids_ref[...]                                        # [nb, M] (offsets folded in)
    iota_r = lax.broadcasted_iota(jnp.int32, (nb, table_rows), 1)
    hit = iota_r == ids[:, 0:1]
    for m in range(1, utt_len):                               # static; one live bool acc
        hit = jnp.logical_or(hit, iota_r == ids[:, m:m + 1])
    sel = hit.astype(jnp.bfloat16)                            # [nb, R] exact 0/1

    # Fused embedding gather + sum-over-positions: one K=R matmul, 2 bf16
    # passes (table pre-split hi/lo in the wrapper; selector exact in bf16).
    embs = dot(sel, emb_hi_ref[...]) + dot(sel, emb_lo_ref[...])   # [nb, E] f32

    # TODO(synk): dropout implemented as identity (eval-mode semantics).
    x = jnp.tanh(embs)

    # Linear(E -> O_pad), ~f32 via 3 bf16 passes with pre-split weights.
    x_hi = x.astype(jnp.bfloat16)
    x_lo = (x - x_hi.astype(jnp.float32)).astype(jnp.bfloat16)
    w_hi = w2_hi_ref[...]
    w_lo = w2_lo_ref[...]
    out_ref[...] = (dot(x_hi, w_hi) + dot(x_lo, w_hi) + dot(x_hi, w_lo)
                    + b2_ref[...])


def fc2l_forward(utts, emb_table, w2, b2, *, vocab_size, num_meaning_types,
                 meanings_per_type, block_n=None):
    """utts: [M, N] int32; emb_table: [M*(V+1), E] f32;
    w2: [E, A*Vm] f32 (transpose of torch weight); b2: [A*Vm] or [1, A*Vm]."""
    M, N = utts.shape
    R, E = emb_table.shape
    O = num_meaning_types * meanings_per_type
    assert R == M * (vocab_size + 1) and w2.shape == (E, O)

    # Fold per-position offsets into the ids on the host; lane-dense [N, M].
    offsets = (jnp.arange(M, dtype=jnp.int32) * (vocab_size + 1))[None, :]
    ids = jnp.asarray(utts, jnp.int32).T + offsets            # [N, M]

    # Pre-split constant weights into bf16 hi/lo halves (removes per-grid-step
    # VPU cast/subtract work; total DMA bytes unchanged).
    emb_table = jnp.asarray(emb_table, jnp.float32)
    emb_hi = emb_table.astype(jnp.bfloat16)
    emb_lo = (emb_table - emb_hi.astype(jnp.float32)).astype(jnp.bfloat16)

    w2 = jnp.asarray(w2, jnp.float32)
    b2 = jnp.asarray(b2, jnp.float32).reshape(1, O)

    # Pad output feature axis to a 128-lane multiple -> unmasked stores.
    O_pad = _round_up(O, 128)
    if O_pad != O:
        w2 = jnp.pad(w2, ((0, 0), (0, O_pad - O)))
        b2 = jnp.pad(b2, ((0, 0), (0, O_pad - O)))
    w2_hi = w2.astype(jnp.bfloat16)
    w2_lo = (w2 - w2_hi.astype(jnp.float32)).astype(jnp.bfloat16)

    # Batch tile; batch grid axis is "parallel" (megacore sharding on v7x).
    if block_n is None:
        block_n = _default_block_n(N)
    N_pad = _round_up(N, block_n)
    if N_pad != N:
        ids = jnp.pad(ids, ((0, N_pad - N), (0, 0)))

    cost = pl.CostEstimate(
        # 2 MXU passes over the [Nb,R]@[R,E] selector dot + 3 over [Nb,E]@[E,O].
        flops=int(N_pad) * (2 * 2 * R * E + 3 * 2 * E * O_pad),
        transcendentals=int(N_pad) * E,                        # tanh
        bytes_accessed=(N_pad * M * 4 + 2 * R * E * 2 + 2 * E * O_pad * 2
                        + O_pad * 4 + N_pad * O_pad * 4),
    )

    out = pl.pallas_call(
        _fc2l_kernel,
        out_shape=jax.ShapeDtypeStruct((N_pad, O_pad), jnp.float32),
        grid=(N_pad // block_n,),
        in_specs=[
            pl.BlockSpec((block_n, M), lambda i: (i, 0)),      # ids (offset utts.T)
            # NOTE: for realistic vocab/utt_len the table should be tiled on a
            # second "arbitrary" grid axis with a VMEM f32 accumulator and
            # single-buffered (pl.Buffered(1)) to fit v7x's 64 MiB VMEM; at
            # these shapes the whole table is a few KiB so it stays resident.
            pl.BlockSpec((R, E), lambda i: (0, 0)),            # emb hi (bf16)
            pl.BlockSpec((R, E), lambda i: (0, 0)),            # emb lo (bf16)
            pl.BlockSpec((E, O_pad), lambda i: (0, 0)),        # W2 hi (bf16, padded)
            pl.BlockSpec((E, O_pad), lambda i: (0, 0)),        # W2 lo (bf16, padded)
            pl.BlockSpec((1, O_pad), lambda i: (0, 0)),        # b2 (padded)
        ],
        out_specs=pl.BlockSpec((block_n, O_pad), lambda i: (i, 0)),
        compiler_params=pltpu.CompilerParams(
            dimension_semantics=("parallel",)),
        cost_estimate=cost,
    )(ids, emb_hi, emb_lo, w2_hi, w2_lo, b2)

    return out[:N, :O].reshape(N, num_meaning_types, meanings_per_type)


def fc2l_reference(utts, emb_table, w2, b2, *, vocab_size, num_meaning_types,
                   meanings_per_type):
    M, N = utts.shape
    offset = (jnp.arange(M, dtype=jnp.int32) * (vocab_size + 1))[:, None]
    idx = utts + offset                       # [M, N]
    embs = emb_table[idx].sum(axis=0)         # [N, E]  exact f32 gather
    x = jnp.tanh(embs)                        # dropout = identity (eval)
    y = jnp.dot(x, w2, precision=lax.Precision.HIGHEST) + b2
    return y.reshape(N, num_meaning_types, meanings_per_type)


if __name__ == "__main__":
    # Small, TPU-friendly shapes consistent with the module.
    embedding_size = 32
    vocab_size = 15            # tokens in [0, vocab_size] -> V+1 = 16 ids per slot
    utt_len = 8
    num_meaning_types = 4
    meanings_per_type = 8
    batch = 512                # exercises the per-generation block_n picker (>=2 grid steps)

    R = utt_len * (vocab_size + 1)            # 128 embedding rows
    O = num_meaning_types * meanings_per_type

    key = jax.random.PRNGKey(0)
    k_utts, k_emb, k_w2, k_b2 = jax.random.split(key, 4)

    utts = jax.random.randint(k_utts, (utt_len, batch), 0, vocab_size + 1,
                              dtype=jnp.int32)
    emb_table = jax.random.normal(k_emb, (R, embedding_size), dtype=jnp.float32)
    # torch nn.Linear(E, O): weight [O, E], bias [O]; we pass weight.T and bias.
    w2 = (jax.random.normal(k_w2, (O, embedding_size), dtype=jnp.float32)
          * (1.0 / jnp.sqrt(embedding_size))).T               # [E, O]
    b2 = jax.random.normal(k_b2, (O,), dtype=jnp.float32) * 0.1

    out = fc2l_forward(utts, emb_table, w2, b2,
                       vocab_size=vocab_size,
                       num_meaning_types=num_meaning_types,
                       meanings_per_type=meanings_per_type)
    out = jax.block_until_ready(out)

    ref = fc2l_reference(utts, emb_table, w2, b2,
                         vocab_size=vocab_size,
                         num_meaning_types=num_meaning_types,
                         meanings_per_type=meanings_per_type)

    assert out.shape == (batch, num_meaning_types, meanings_per_type)
    max_err = float(jnp.max(jnp.abs(out - ref)))
    assert jnp.allclose(out, ref, rtol=1e-3, atol=2e-3), f"max abs err = {max_err}"

    print("KERNEL_OK")
</pallas_src>

<mosaic_0001>
module attributes {stable_mosaic.version = 11 : i64} {
  func.func @_fc2l_kernel(%arg0: i32, %arg1: memref<128x8xi32, #tpu.memory_space<vmem>>, %arg2: memref<128x32xbf16, #tpu.memory_space<vmem>>, %arg3: memref<128x32xbf16, #tpu.memory_space<vmem>>, %arg4: memref<32x128xbf16, #tpu.memory_space<vmem>>, %arg5: memref<32x128xbf16, #tpu.memory_space<vmem>>, %arg6: memref<1x128xf32, #tpu.memory_space<vmem>>, %arg7: memref<128x128xf32, #tpu.memory_space<vmem>>) attributes {dimension_semantics = [#tpu.dimension_semantics<parallel>], iteration_bounds = array<i64: 4>, scalar_prefetch = 0 : i64, scratch_operands = 0 : i64, tpu.core_type = #tpu.core_type<tc>, window_params = [{transform_indices = @transform_0, window_bounds = array<i64: 128, 8>}, {pipeline_mode = #tpu.pipeline_mode<synchronous>, transform_indices = @transform_1, window_bounds = array<i64: 128, 32>}, {pipeline_mode = #tpu.pipeline_mode<synchronous>, transform_indices = @transform_2, window_bounds = array<i64: 128, 32>}, {pipeline_mode = #tpu.pipeline_mode<synchronous>, transform_indices = @transform_3, window_bounds = array<i64: 32, 128>}, {pipeline_mode = #tpu.pipeline_mode<synchronous>, transform_indices = @transform_4, window_bounds = array<i64: 32, 128>}, {pipeline_mode = #tpu.pipeline_mode<synchronous>, transform_indices = @transform_5, window_bounds = array<i64: 1, 128>}, {transform_indices = @transform_6, window_bounds = array<i64: 128, 128>}]} {
    %c0 = arith.constant 0 : index
    %c0_0 = arith.constant 0 : index
    %0 = vector.load %arg1[%c0, %c0_0] : memref<128x8xi32, #tpu.memory_space<vmem>>, vector<128x8xi32>
    %1 = tpu.iota {dimensions = array<i32: 1>} : vector<128x128xi32>
    %2 = vector.extract_strided_slice %0 {offsets = [0, 0], sizes = [128, 1], strides = [1, 1]} : vector<128x8xi32> to vector<128x1xi32>
    %3 = vector.broadcast %2 : vector<128x1xi32> to vector<128x128xi32>
    %4 = arith.cmpi eq, %1, %3 : vector<128x128xi32>
    %5 = vector.extract_strided_slice %0 {offsets = [0, 1], sizes = [128, 1], strides = [1, 1]} : vector<128x8xi32> to vector<128x1xi32>
    %6 = vector.broadcast %5 : vector<128x1xi32> to vector<128x128xi32>
    %7 = arith.cmpi eq, %1, %6 : vector<128x128xi32>
    %8 = arith.ori %4, %7 : vector<128x128xi1>
    %9 = vector.extract_strided_slice %0 {offsets = [0, 2], sizes = [128, 1], strides = [1, 1]} : vector<128x8xi32> to vector<128x1xi32>
    %10 = vector.broadcast %9 : vector<128x1xi32> to vector<128x128xi32>
    %11 = arith.cmpi eq, %1, %10 : vector<128x128xi32>
    %12 = arith.ori %8, %11 : vector<128x128xi1>
    %13 = vector.extract_strided_slice %0 {offsets = [0, 3], sizes = [128, 1], strides = [1, 1]} : vector<128x8xi32> to vector<128x1xi32>
    %14 = vector.broadcast %13 : vector<128x1xi32> to vector<128x128xi32>
    %15 = arith.cmpi eq, %1, %14 : vector<128x128xi32>
    %16 = arith.ori %12, %15 : vector<128x128xi1>
    %17 = vector.extract_strided_slice %0 {offsets = [0, 4], sizes = [128, 1], strides = [1, 1]} : vector<128x8xi32> to vector<128x1xi32>
    %18 = vector.broadcast %17 : vector<128x1xi32> to vector<128x128xi32>
    %19 = arith.cmpi eq, %1, %18 : vector<128x128xi32>
    %20 = arith.ori %16, %19 : vector<128x128xi1>
    %21 = vector.extract_strided_slice %0 {offsets = [0, 5], sizes = [128, 1], strides = [1, 1]} : vector<128x8xi32> to vector<128x1xi32>
    %22 = vector.broadcast %21 : vector<128x1xi32> to vector<128x128xi32>
    %23 = arith.cmpi eq, %1, %22 : vector<128x128xi32>
    %24 = arith.ori %20, %23 : vector<128x128xi1>
    %25 = vector.extract_strided_slice %0 {offsets = [0, 6], sizes = [128, 1], strides = [1, 1]} : vector<128x8xi32> to vector<128x1xi32>
    %26 = vector.broadcast %25 : vector<128x1xi32> to vector<128x128xi32>
    %27 = arith.cmpi eq, %1, %26 : vector<128x128xi32>
    %28 = arith.ori %24, %27 : vector<128x128xi1>
    %29 = vector.extract_strided_slice %0 {offsets = [0, 7], sizes = [128, 1], strides = [1, 1]} : vector<128x8xi32> to vector<128x1xi32>
    %30 = vector.broadcast %29 : vector<128x1xi32> to vector<128x128xi32>
    %31 = arith.cmpi eq, %1, %30 : vector<128x128xi32>
    %32 = arith.ori %28, %31 : vector<128x128xi1>
    %33 = arith.extui %32 : vector<128x128xi1> to vector<128x128xi32>
    %34 = arith.sitofp %33 : vector<128x128xi32> to vector<128x128xf32>
    %35 = arith.truncf %34 : vector<128x128xf32> to vector<128x128xbf16>
    %c0_1 = arith.constant 0 : index
    %c0_2 = arith.constant 0 : index
    %36 = vector.load %arg2[%c0_1, %c0_2] : memref<128x32xbf16, #tpu.memory_space<vmem>>, vector<128x32xbf16>
    %cst = arith.constant dense<0.000000e+00> : vector<128x32xf32>
    %37 = tpu.matmul %35, %36, %cst {dimension_numbers = #tpu.dot_dimension_numbers<[1], [0], [0], [1], [0, 0, 1, 1], [], []>} : vector<128x128xbf16>, vector<128x32xbf16>, vector<128x32xf32> -> vector<128x32xf32>
    %c0_3 = arith.constant 0 : index
    %c0_4 = arith.constant 0 : index
    %38 = vector.load %arg3[%c0_3, %c0_4] : memref<128x32xbf16, #tpu.memory_space<vmem>>, vector<128x32xbf16>
    %cst_5 = arith.constant dense<0.000000e+00> : vector<128x32xf32>
    %39 = tpu.matmul %35, %38, %cst_5 {dimension_numbers = #tpu.dot_dimension_numbers<[1], [0], [0], [1], [0, 0, 1, 1], [], []>} : vector<128x128xbf16>, vector<128x32xbf16>, vector<128x32xf32> -> vector<128x32xf32>
    %40 = arith.addf %37, %39 : vector<128x32xf32>
    %41 = math.tanh %40 : vector<128x32xf32>
    %42 = arith.truncf %41 : vector<128x32xf32> to vector<128x32xbf16>
    %43 = arith.extf %42 : vector<128x32xbf16> to vector<128x32xf32>
    %44 = arith.subf %41, %43 : vector<128x32xf32>
    %45 = arith.truncf %44 : vector<128x32xf32> to vector<128x32xbf16>
    %c0_6 = arith.constant 0 : index
    %c0_7 = arith.constant 0 : index
    %46 = vector.load %arg4[%c0_6, %c0_7] : memref<32x128xbf16, #tpu.memory_space<vmem>>, vector<32x128xbf16>
    %c0_8 = arith.constant 0 : index
    %c0_9 = arith.constant 0 : index
    %47 = vector.load %arg5[%c0_8, %c0_9] : memref<32x128xbf16, #tpu.memory_space<vmem>>, vector<32x128xbf16>
    %cst_10 = arith.constant dense<0.000000e+00> : vector<128x128xf32>
    %48 = tpu.matmul %42, %46, %cst_10 {dimension_numbers = #tpu.dot_dimension_numbers<[1], [0], [0], [1], [0, 0, 1, 1], [], []>} : vector<128x32xbf16>, vector<32x128xbf16>, vector<128x128xf32> -> vector<128x128xf32>
    %cst_11 = arith.constant dense<0.000000e+00> : vector<128x128xf32>
    %49 = tpu.matmul %45, %46, %cst_11 {dimension_numbers = #tpu.dot_dimension_numbers<[1], [0], [0], [1], [0, 0, 1, 1], [], []>} : vector<128x32xbf16>, vector<32x128xbf16>, vector<128x128xf32> -> vector<128x128xf32>
    %50 = arith.addf %48, %49 : vector<128x128xf32>
    %cst_12 = arith.constant dense<0.000000e+00> : vector<128x128xf32>
    %51 = tpu.matmul %42, %47, %cst_12 {dimension_numbers = #tpu.dot_dimension_numbers<[1], [0], [0], [1], [0, 0, 1, 1], [], []>} : vector<128x32xbf16>, vector<32x128xbf16>, vector<128x128xf32> -> vector<128x128xf32>
    %52 = arith.addf %50, %51 : vector<128x128xf32>
    %c0_13 = arith.constant 0 : index
    %c0_14 = arith.constant 0 : index
    %53 = vector.load %arg6[%c0_13, %c0_14] : memref<1x128xf32, #tpu.memory_space<vmem>>, vector<1x128xf32>
    %54 = vector.broadcast %53 : vector<1x128xf32> to vector<128x128xf32>
    %55 = arith.addf %52, %54 : vector<128x128xf32>
    %c0_15 = arith.constant 0 : index
    %c0_16 = arith.constant 0 : index
    %56 = vector.load %arg7[%c0_15, %c0_16] : memref<128x128xf32, #tpu.memory_space<vmem>>, vector<128x128xf32>
    tpu.vector_store %arg7[%c0_15, %c0_16], %55 {strides = array<i32>} : memref<128x128xf32, #tpu.memory_space<vmem>>, vector<128x128xf32>,
    return
  }
  func.func @transform_0(%arg0: i32) -> (i32, i32) {
    %c0_i32 = arith.constant 0 : i32
    %c0_i32_0 = arith.constant 0 : i32
    return %arg0, %c0_i32 : i32, i32
  }
  func.func @transform_1(%arg0: i32) -> (i32, i32) {
    %c0_i32 = arith.constant 0 : i32
    %c0_i32_0 = arith.constant 0 : i32
    %c0_i32_1 = arith.constant 0 : i32
    return %c0_i32, %c0_i32_0 : i32, i32
  }
  func.func @transform_2(%arg0: i32) -> (i32, i32) {
    %c0_i32 = arith.constant 0 : i32
    %c0_i32_0 = arith.constant 0 : i32
    %c0_i32_1 = arith.constant 0 : i32
    return %c0_i32, %c0_i32_0 : i32, i32
  }
  func.func @transform_3(%arg0: i32) -> (i32, i32) {
    %c0_i32 = arith.constant 0 : i32
    %c0_i32_0 = arith.constant 0 : i32
    %c0_i32_1 = arith.constant 0 : i32
    return %c0_i32, %c0_i32_0 : i32, i32
  }
  func.func @transform_4(%arg0: i32) -> (i32, i32) {
    %c0_i32 = arith.constant 0 : i32
    %c0_i32_0 = arith.constant 0 : i32
    %c0_i32_1 = arith.constant 0 : i32
    return %c0_i32, %c0_i32_0 : i32, i32
  }
  func.func @transform_5(%arg0: i32) -> (i32, i32) {
    %c0_i32 = arith.constant 0 : i32
    %c0_i32_0 = arith.constant 0 : i32
    %c0_i32_1 = arith.constant 0 : i32
    return %c0_i32, %c0_i32_0 : i32, i32
  }
  func.func @transform_6(%arg0: i32) -> (i32, i32) {
    %c0_i32 = arith.constant 0 : i32
    %c0_i32_0 = arith.constant 0 : i32
    return %arg0, %c0_i32 : i32, i32
  }
}

</mosaic_0001>

<llo_original>
// kernel: tpu_custom_call.1
$region0: #{tpu_custom_call.1}
  #allocation0 [shape = 'u32[]', space=smem, size = 0x4, offset = 0x4, fixed_abs, tag = 'smem constant byte address 0x4 - core index']
  #allocation1 [shape = 'u32[144,128]{1,0:T(1,128)}', space=vmem, size = 0x12000, scoped, tag = 'internal scratch']
  %s0 = inlined_call_operand.vmem [shape: s32[512,8], index: 0, kind: input, shape index: {}]
  %s1 = inlined_call_operand.vmem [shape: bf16[128,32], index: 1, kind: input, shape index: {}]
  %s2 = inlined_call_operand.vmem [shape: bf16[128,32], index: 2, kind: input, shape index: {}]
  %s3 = inlined_call_operand.vmem [shape: bf16[32,128], index: 3, kind: input, shape index: {}]
  %s4 = inlined_call_operand.vmem [shape: bf16[32,128], index: 4, kind: input, shape index: {}]
  %s5 = inlined_call_operand.vmem [shape: f32[1,128], index: 5, kind: input, shape index: {}]
  %s6 = inlined_call_operand.hbm [shape: f32[512,128], index: 6, kind: output, shape index: {}]
  %s7 = sld [smem:[#allocation0]]
  $region57: #{tpu_custom_call.1} parent=0
    _
  %s9 = ssub.s32 1, %s7
  %s10 = scalar_select 0, %s9, %s7
  $region1: #{tpu_custom_call.1} parent=0
    #allocation2 [shape = 'u8[131072]{0}', space=vmem, size = 0x20000, scoped, tag = 'output window, operand 0']
    #allocation3 [shape = 's32[2]{0}', space=sflag, size = 0x8, scoped, tag = 'scoped memory for tpu_custom_call.1']
    %11 = vsyncpa [#allocation3], 0
    %s12 = scalar_lea.sflag [#allocation3], 1
    %13 = vsyncpa %s12, 0
    loop: start=0, step=1, limit=6
    $region2: #{tpu_custom_call.1} parent=1 // loop_pre_header
      _
    $region3: #{tpu_custom_call.1} parent=1 // loop_header
      %s15 = sphi 0, %s19
      %p16 = scmp.ge.s32.totalorder %s15, 6
      %s25 = sphi 0, %s27
      %s28 = sphi 0, %s25
      %s29 = sphi 0, %s28
      %s45 = sphi 0, %s29
      %s49 = sphi 0, %s49
      %s51 = sphi 0, %s49
      %s52 = sphi 0, %s51
      %s66 = sphi 0, %s52
      %s70 = sphi 0, %s70
      %s72 = sphi 0, %s70
      %s73 = sphi 0, %s72
      %s87 = sphi 0, %s73
      %s91 = sphi 0, %s91
      %s93 = sphi 0, %s91
      %s94 = sphi 0, %s93
      %s108 = sphi 0, %s94
      %s112 = sphi 0, %s112
      %s114 = sphi 0, %s112
      %s115 = sphi 0, %s114
      %s129 = sphi 0, %s115
      %s133 = sphi 0, %s133
      %s135 = sphi 0, %s133
      %s136 = sphi 0, %s135
      %s150 = sphi 0, %s136
      %s156 = sphi 0, %s158
      %s159 = sphi 0, %s156
      %s160 = sphi 0, %s159
      %s176 = sphi 0, %s160
    $region4: #{tpu_custom_call.1} parent=1 // loop_header_branch
      %18 = sbr.rel (%p16) target = $region8
    $region5: #{tpu_custom_call.1} parent=1 // loop_body
      %s20 = ssub.s32 %s15, 1
      %s21 = ssub.s32 %s15, 2
      %s22 = sadd.s32 %s15, 1
      %s23 = ssub.s32 %s15, %s22
      %p24 = scmp.eq.s32.totalorder %s23, 0
      %s26 = sadd.s32 %s25, 1
      %s27 = scalar_select %p24, %s25, %s26
      %p30 = pneg %p24
      %p31 = scmp.eq.s32.totalorder %s15, 3
      %p32 = por %p30, %p31
      %p33 = scmp.ne.s32.totalorder %s25, %s28
      %p34 = scmp.eq.s32.totalorder %s15, 0
      %p35 = por %p33, %p34
      %p36 = scmp.ne.s32.totalorder %s25, %s28
      %p37 = scmp.eq.s32.totalorder %s20, 3
      %p38 = por %p36, %p37
      %p39 = scmp.ne.s32.totalorder %s28, %s29
      %p40 = scmp.eq.s32.totalorder %s20, 0
      %p41 = por %p39, %p40
      %p42 = scmp.ne.s32.totalorder %s28, %s29
      %p43 = scmp.eq.s32.totalorder %s21, 3
      %p44 = por %p42, %p43
      %p46 = scmp.ne.s32.totalorder %s29, %s45
      %p47 = scmp.eq.s32.totalorder %s21, 0
      %p48 = por %p46, %p47
      %s50 = sadd.s32 %s49, 1
      %p53 = scmp.eq.s32.totalorder %s15, 3
      %p54 = scmp.ne.s32.totalorder %s49, %s51
      %p55 = scmp.eq.s32.totalorder %s15, 0
      %p56 = por %p54, %p55
      %p57 = scmp.ne.s32.totalorder %s49, %s51
      %p58 = scmp.eq.s32.totalorder %s20, 3
      %p59 = por %p57, %p58
      %p60 = scmp.ne.s32.totalorder %s51, %s52
      %p61 = scmp.eq.s32.totalorder %s20, 0
      %p62 = por %p60, %p61
      %p63 = scmp.ne.s32.totalorder %s51, %s52
      %p64 = scmp.eq.s32.totalorder %s21, 3
      %p65 = por %p63, %p64
      %p67 = scmp.ne.s32.totalorder %s52, %s66
      %p68 = scmp.eq.s32.totalorder %s21, 0
      %p69 = por %p67, %p68
      %s71 = sadd.s32 %s70, 1
      %p74 = scmp.eq.s32.totalorder %s15, 3
      %p75 = scmp.ne.s32.totalorder %s70, %s72
      %p76 = scmp.eq.s32.totalorder %s15, 0
      %p77 = por %p75, %p76
      %p78 = scmp.ne.s32.totalorder %s70, %s72
      %p79 = scmp.eq.s32.totalorder %s20, 3
      %p80 = por %p78, %p79
      %p81 = scmp.ne.s32.totalorder %s72, %s73
      %p82 = scmp.eq.s32.totalorder %s20, 0
      %p83 = por %p81, %p82
      %p84 = scmp.ne.s32.totalorder %s72, %s73
      %p85 = scmp.eq.s32.totalorder %s21, 3
      %p86 = por %p84, %p85
      %p88 = scmp.ne.s32.totalorder %s73, %s87
      %p89 = scmp.eq.s32.totalorder %s21, 0
      %p90 = por %p88, %p89
      %s92 = sadd.s32 %s91, 1
      %p95 = scmp.eq.s32.totalorder %s15, 3
      %p96 = scmp.ne.s32.totalorder %s91, %s93
      %p97 = scmp.eq.s32.totalorder %s15, 0
      %p98 = por %p96, %p97
      %p99 = scmp.ne.s32.totalorder %s91, %s93
      %p100 = scmp.eq.s32.totalorder %s20, 3
      %p101 = por %p99, %p100
      %p102 = scmp.ne.s32.totalorder %s93, %s94
      %p103 = scmp.eq.s32.totalorder %s20, 0
      %p104 = por %p102, %p103
      %p105 = scmp.ne.s32.totalorder %s93, %s94
      %p106 = scmp.eq.s32.totalorder %s21, 3
      %p107 = por %p105, %p106
      %p109 = scmp.ne.s32.totalorder %s94, %s108
      %p110 = scmp.eq.s32.totalorder %s21, 0
      %p111 = por %p109, %p110
      %s113 = sadd.s32 %s112, 1
      %p116 = scmp.eq.s32.totalorder %s15, 3
      %p117 = scmp.ne.s32.totalorder %s112, %s114
      %p118 = scmp.eq.s32.totalorder %s15, 0
      %p119 = por %p117, %p118
      %p120 = scmp.ne.s32.totalorder %s112, %s114
      %p121 = scmp.eq.s32.totalorder %s20, 3
      %p122 = por %p120, %p121
      %p123 = scmp.ne.s32.totalorder %s114, %s115
      %p124 = scmp.eq.s32.totalorder %s20, 0
      %p125 = por %p123, %p124
      %p126 = scmp.ne.s32.totalorder %s114, %s115
      %p127 = scmp.eq.s32.totalorder %s21, 3
      %p128 = por %p126, %p127
      %p130 = scmp.ne.s32.totalorder %s115, %s129
      %p131 = scmp.eq.s32.totalorder %s21, 0
      %p132 = por %p130, %p131
      %s134 = sadd.s32 %s133, 1
      %p137 = scmp.eq.s32.totalorder %s15, 3
      %p138 = scmp.ne.s32.totalorder %s133, %s135
      %p139 = scmp.eq.s32.totalorder %s15, 0
      %p140 = por %p138, %p139
      %p141 = scmp.ne.s32.totalorder %s133, %s135
      %p142 = scmp.eq.s32.totalorder %s20, 3
      %p143 = por %p141, %p142
      %p144 = scmp.ne.s32.totalorder %s135, %s136
      %p145 = scmp.eq.s32.totalorder %s20, 0
      %p146 = por %p144, %p145
      %p147 = scmp.ne.s32.totalorder %s135, %s136
      %p148 = scmp.eq.s32.totalorder %s21, 3
      %p149 = por %p147, %p148
      %p151 = scmp.ne.s32.totalorder %s136, %s150
      %p152 = scmp.eq.s32.totalorder %s21, 0
      %p153 = por %p151, %p152
      %s154 = ssub.s32 %s15, %s22
      %p155 = scmp.eq.s32.totalorder %s154, 0
      %s157 = sadd.s32 %s156, 1
      %s158 = scalar_select %p155, %s156, %s157
      %p161 = pneg %p155
      %p162 = scmp.eq.s32.totalorder %s15, 3
      %p163 = por %p161, %p162
      %p164 = scmp.ne.s32.totalorder %s156, %s159
      %p165 = scmp.eq.s32.totalorder %s15, 0
      %p166 = por %p164, %p165
      %p167 = scmp.ne.s32.totalorder %s156, %s159
      %p168 = scmp.eq.s32.totalorder %s20, 3
      %p169 = por %p167, %p168
      %p170 = scmp.ne.s32.totalorder %s159, %s160
      %p171 = scmp.eq.s32.totalorder %s20, 0
      %p172 = por %p170, %p171
      %p173 = scmp.ne.s32.totalorder %s159, %s160
      %p174 = scmp.eq.s32.totalorder %s21, 3
      %p175 = por %p173, %p174
      %p177 = scmp.ne.s32.totalorder %s160, %s176
      %p178 = scmp.eq.s32.totalorder %s21, 0
      %p179 = por %p177, %p178
      %p180 = scmp.le.s32.totalorder 1, %s15
      %p181 = scmp.lt.s32.totalorder %s15, 5
      %p182 = pnand %p180, %p181
      %p183 = pneg %p182
      // Predicated region
      $region9: #{tpu_custom_call.1} parent=5 // pred_check
        _
      $region10: #{tpu_custom_call.1} parent=5 // pred_check_branch
        %185 = sbr.rel (%p182) target = $region12
      $region11: #{tpu_custom_call.1} parent=5 // pred_region
        %s186 = ssub.s32 %s15, 1
        // Predicated region
        $region13: #{tpu_custom_call.1} parent=11 // pred_check
          %p187 = pneg %p62
        $region14: #{tpu_custom_call.1} parent=11 // pred_check_branch
          %189 = sbr.rel (%p187) target = $region16
        $region15: #{tpu_custom_call.1} parent=11 // pred_region
          _
        $region16: #{tpu_custom_call.1} parent=11 // pred_fallthru
          _
        // Predicated region
        $region17: #{tpu_custom_call.1} parent=11 // pred_check
          %p190 = pneg %p83
        $region18: #{tpu_custom_call.1} parent=11 // pred_check_branch
          %192 = sbr.rel (%p190) target = $region20
        $region19: #{tpu_custom_call.1} parent=11 // pred_region
          _
        $region20: #{tpu_custom_call.1} parent=11 // pred_fallthru
          _
        // Predicated region
        $region21: #{tpu_custom_call.1} parent=11 // pred_check
          %p193 = pneg %p104
        $region22: #{tpu_custom_call.1} parent=11 // pred_check_branch
          %195 = sbr.rel (%p193) target = $region24
        $region23: #{tpu_custom_call.1} parent=11 // pred_region
          _
        $region24: #{tpu_custom_call.1} parent=11 // pred_fallthru
          _
        // Predicated region
        $region25: #{tpu_custom_call.1} parent=11 // pred_check
          %p196 = pneg %p125
        $region26: #{tpu_custom_call.1} parent=11 // pred_check_branch
          %198 = sbr.rel (%p196) target = $region28
        $region27: #{tpu_custom_call.1} parent=11 // pred_region
          _
        $region28: #{tpu_custom_call.1} parent=11 // pred_fallthru
          _
        // Predicated region
        $region29: #{tpu_custom_call.1} parent=11 // pred_check
          %p199 = pneg %p146
        $region30: #{tpu_custom_call.1} parent=11 // pred_check_branch
          %201 = sbr.rel (%p199) target = $region32
        $region31: #{tpu_custom_call.1} parent=11 // pred_region
          _
        $region32: #{tpu_custom_call.1} parent=11 // pred_fallthru
          _
      $region12: #{tpu_custom_call.1} parent=5 // pred_fallthru
        _
      %p202 = scmp.lt.s32.totalorder %s15, 4
      // Predicated region
      $region33: #{tpu_custom_call.1} parent=5 // pred_check
        %p203 = pneg %p202
      $region34: #{tpu_custom_call.1} parent=5 // pred_check_branch
        %205 = sbr.rel (%p203) target = $region36
      $region35: #{tpu_custom_call.1} parent=5 // pred_region
        // Predicated region
        $region37: #{tpu_custom_call.1} parent=35 // pred_check
          %p206 = pneg %p35
        $region38: #{tpu_custom_call.1} parent=35 // pred_check_branch
          %208 = sbr.rel (%p206) target = $region40
        $region39: #{tpu_custom_call.1} parent=35 // pred_region
          %s209 = smul.u32 16, %s15
          %p210 = scmp.lt.s32.totalorder %s209, 63
          %s211 = scalar_select %p210, %s209, 63
          %s212 = smul.addr %s211, 8
          %s213 = scalar_lea.vmem %s0, %s212
          %s214 = smul.u32 16, %s15
        $region40: #{tpu_custom_call.1} parent=35 // pred_fallthru
          _
      $region36: #{tpu_custom_call.1} parent=5 // pred_fallthru
        _
      %p215 = scmp.le.s32.totalorder 1, %s15
      %p216 = scmp.lt.s32.totalorder %s15, 5
      %p217 = pnand %p215, %p216
      %p218 = pneg %p217
      // Predicated region
      $region41: #{tpu_custom_call.1} parent=5 // pred_check
        _
      $region42: #{tpu_custom_call.1} parent=5 // pred_check_branch
        %220 = sbr.rel (%p217) target = $region44
      $region43: #{tpu_custom_call.1} parent=5 // pred_region
        %s221 = ssub.s32 %s15, 1
        %s222 = smul.u32 16, %s20
        %p223 = scmp.lt.s32.totalorder %s222, 63
        %s224 = scalar_select %p223, %s222, 63
        %s225 = smul.addr %s224, 8
        %s226 = scalar_lea.vmem %s0, %s225
        %p227 = pneg %p41
        %p228 = pneg %p38
        %p229 = pneg %p62
        %p230 = pneg %p59
        %p231 = pneg %p83
        %p232 = pneg %p80
        %p233 = pneg %p104
        %p234 = pneg %p101
        %p235 = pneg %p125
        %p236 = pneg %p122
        %p237 = pneg %p146
        %p238 = pneg %p143
        %p239 = pneg %p172
        %p240 = pneg %p169
        %s241 = sand.u32 %s159, 1
        %s242 = scalar_lea.sflag [#allocation3], %s241
        %s243 = sand.u32 %s159, 1
        %s244 = smul.addr %s243, 128
        %s245 = scalar_lea.vmem [#allocation2], %s244
        %s246 = smul.u32 16, %s20
        %p247 = scmp.lt.s32.totalorder %s246, 63
        %s248 = scalar_select %p247, %s246, 63
        %s249 = smul.addr %s248, 8
        %s250 = scalar_lea.vmem %s0, %s249
        %s251 = smul.u32 16, %s20
        %s252 = smul.u32 16, %s20
        %v254 = vld [vmem:[%s250] sm:$0xff]
        %v255 = vld [vmem:[%s250 + $0x8] sm:$0xff]
        %v256 = vld [vmem:[%s250 + $0x10] sm:$0xff]
        %v257 = vld [vmem:[%s250 + $0x18] sm:$0xff]
        %v258 = vld [vmem:[%s250 + $0x20] sm:$0xff]
        %v259 = vld [vmem:[%s250 + $0x28] sm:$0xff]
        %v260 = vld [vmem:[%s250 + $0x30] sm:$0xff]
        %v261 = vld [vmem:[%s250 + $0x38] sm:$0xff]
        %v262 = vld [vmem:[%s250 + $0x40] sm:$0xff]
        %v263 = vld [vmem:[%s250 + $0x48] sm:$0xff]
        %v264 = vld [vmem:[%s250 + $0x50] sm:$0xff]
        %v265 = vld [vmem:[%s250 + $0x58] sm:$0xff]
        %v266 = vld [vmem:[%s250 + $0x60] sm:$0xff]
        %v267 = vld [vmem:[%s250 + $0x68] sm:$0xff]
        %v268 = vld [vmem:[%s250 + $0x70] sm:$0xff]
        %v269 = vld [vmem:[%s250 + $0x78] sm:$0xff]
        %v270 = vlaneseq
        %v271 = vand.u32 %v270, 127
        %272 = vset.pattern.permute.xlu0 0
        %273 = vperm.xlu0 %272, %v254
        %v274 = vpop.permute.xlu0 %273
        %275 = vset.pattern.permute.xlu0 0
        %276 = vperm.xlu0 %275, %v255
        %v277 = vpop.permute.xlu0 %276
        %278 = vset.pattern.permute.xlu0 0
        %279 = vperm.xlu0 %278, %v256
        %v280 = vpop.permute.xlu0 %279
        %281 = vset.pattern.permute.xlu0 0
        %282 = vperm.xlu0 %281, %v257
        %v283 = vpop.permute.xlu0 %282
        %284 = vset.pattern.permute.xlu0 0
        %285 = vperm.xlu0 %284, %v258
        %v286 = vpop.permute.xlu0 %285
        %287 = vset.pattern.permute.xlu0 0
        %288 = vperm.xlu0 %287, %v259
        %v289 = vpop.permute.xlu0 %288
        %290 = vset.pattern.permute.xlu0 0
        %291 = vperm.xlu0 %290, %v260
        %v292 = vpop.permute.xlu0 %291
        %293 = vset.pattern.permute.xlu0 0
        %294 = vperm.xlu0 %293, %v261
        %v295 = vpop.permute.xlu0 %294
        %296 = vset.pattern.permute.xlu0 0
        %297 = vperm.xlu0 %296, %v262
        %v298 = vpop.permute.xlu0 %297
        %299 = vset.pattern.permute.xlu0 0
        %300 = vperm.xlu0 %299, %v263
        %v301 = vpop.permute.xlu0 %300
        %302 = vset.pattern.permute.xlu0 0
        %303 = vperm.xlu0 %302, %v264
        %v304 = vpop.permute.xlu0 %303
        %305 = vset.pattern.permute.xlu0 0
        %306 = vperm.xlu0 %305, %v265
        %v307 = vpop.permute.xlu0 %306
        %308 = vset.pattern.permute.xlu0 0
        %309 = vperm.xlu0 %308, %v266
        %v310 = vpop.permute.xlu0 %309
        %311 = vset.pattern.permute.xlu0 0
        %312 = vperm.xlu0 %311, %v267
        %v313 = vpop.permute.xlu0 %312
        %314 = vset.pattern.permute.xlu0 0
        %315 = vperm.xlu0 %314, %v268
        %v316 = vpop.permute.xlu0 %315
        %317 = vset.pattern.permute.xlu0 0
        %318 = vperm.xlu0 %317, %v269
        %v319 = vpop.permute.xlu0 %318
        %vm320 = vcmp.eq.s32.totalorder %v271, %v274
        %vm321 = vcmp.eq.s32.totalorder %v271, %v277
        %vm322 = vcmp.eq.s32.totalorder %v271, %v280
        %vm323 = vcmp.eq.s32.totalorder %v271, %v283
        %vm324 = vcmp.eq.s32.totalorder %v271, %v286
        %vm325 = vcmp.eq.s32.totalorder %v271, %v289
        %vm326 = vcmp.eq.s32.totalorder %v271, %v292
        %vm327 = vcmp.eq.s32.totalorder %v271, %v295
        %vm328 = vcmp.eq.s32.totalorder %v271, %v298
        %vm329 = vcmp.eq.s32.totalorder %v271, %v301
        %vm330 = vcmp.eq.s32.totalorder %v271, %v304
        %vm331 = vcmp.eq.s32.totalorder %v271, %v307
        %vm332 = vcmp.eq.s32.totalorder %v271, %v310
        %vm333 = vcmp.eq.s32.totalorder %v271, %v313
        %vm334 = vcmp.eq.s32.totalorder %v271, %v316
        %vm335 = vcmp.eq.s32.totalorder %v271, %v319
        %336 = vset.pattern.permute.xlu0 1
        %337 = vperm.xlu0 %336, %v254
        %v338 = vpop.permute.xlu0 %337
        %339 = vset.pattern.permute.xlu0 1
        %340 = vperm.xlu0 %339, %v255
        %v341 = vpop.permute.xlu0 %340
        %342 = vset.pattern.permute.xlu0 1
        %343 = vperm.xlu0 %342, %v256
        %v344 = vpop.permute.xlu0 %343
        %345 = vset.pattern.permute.xlu0 1
        %346 = vperm.xlu0 %345, %v257
        %v347 = vpop.permute.xlu0 %346
        %348 = vset.pattern.permute.xlu0 1
        %349 = vperm.xlu0 %348, %v258
        %v350 = vpop.permute.xlu0 %349
        %351 = vset.pattern.permute.xlu0 1
        %352 = vperm.xlu0 %351, %v259
        %v353 = vpop.permute.xlu0 %352
        %354 = vset.pattern.permute.xlu0 1
        %355 = vperm.xlu0 %354, %v260
        %v356 = vpop.permute.xlu0 %355
        %357 = vset.pattern.permute.xlu0 1
        %358 = vperm.xlu0 %357, %v261
        %v359 = vpop.permute.xlu0 %358
        %360 = vset.pattern.permute.xlu0 1
        %361 = vperm.xlu0 %360, %v262
        %v362 = vpop.permute.xlu0 %361
        %363 = vset.pattern.permute.xlu0 1
        %364 = vperm.xlu0 %363, %v263
        %v365 = vpop.permute.xlu0 %364
        %366 = vset.pattern.permute.xlu0 1
        %367 = vperm.xlu0 %366, %v264
        %v368 = vpop.permute.xlu0 %367
        %369 = vset.pattern.permute.xlu0 1
        %370 = vperm.xlu0 %369, %v265
        %v371 = vpop.permute.xlu0 %370
        %372 = vset.pattern.permute.xlu0 1
        %373 = vperm.xlu0 %372, %v266
        %v374 = vpop.permute.xlu0 %373
        %375 = vset.pattern.permute.xlu0 1
        %376 = vperm.xlu0 %375, %v267
        %v377 = vpop.permute.xlu0 %376
        %378 = vset.pattern.permute.xlu0 1
        %379 = vperm.xlu0 %378, %v268
        %v380 = vpop.permute.xlu0 %379
        %381 = vset.pattern.permute.xlu0 1
        %382 = vperm.xlu0 %381, %v269
        %v383 = vpop.permute.xlu0 %382
        %vm384 = vcmp.eq.s32.totalorder %v271, %v338
        %vm385 = vcmp.eq.s32.totalorder %v271, %v341
        %vm386 = vcmp.eq.s32.totalorder %v271, %v344
        %vm387 = vcmp.eq.s32.totalorder %v271, %v347
        %vm388 = vcmp.eq.s32.totalorder %v271, %v350
        %vm389 = vcmp.eq.s32.totalorder %v271, %v353
        %vm390 = vcmp.eq.s32.totalorder %v271, %v356
        %vm391 = vcmp.eq.s32.totalorder %v271, %v359
        %vm392 = vcmp.eq.s32.totalorder %v271, %v362
        %vm393 = vcmp.eq.s32.totalorder %v271, %v365
        %vm394 = vcmp.eq.s32.totalorder %v271, %v368
        %vm395 = vcmp.eq.s32.totalorder %v271, %v371
        %vm396 = vcmp.eq.s32.totalorder %v271, %v374
        %vm397 = vcmp.eq.s32.totalorder %v271, %v377
        %vm398 = vcmp.eq.s32.totalorder %v271, %v380
        %vm399 = vcmp.eq.s32.totalorder %v271, %v383
        %vm400 = vmor %vm320, %vm384
        %vm401 = vmor %vm321, %vm385
        %vm402 = vmor %vm322, %vm386
        %vm403 = vmor %vm323, %vm387
        %vm404 = vmor %vm324, %vm388
        %vm405 = vmor %vm325, %vm389
        %vm406 = vmor %vm326, %vm390
        %vm407 = vmor %vm327, %vm391
        %vm408 = vmor %vm328, %vm392
        %vm409 = vmor %vm329, %vm393
        %vm410 = vmor %vm330, %vm394
        %vm411 = vmor %vm331, %vm395
        %vm412 = vmor %vm332, %vm396
        %vm413 = vmor %vm333, %vm397
        %vm414 = vmor %vm334, %vm398
        %vm415 = vmor %vm335, %vm399
        %416 = vset.pattern.permute.xlu0 2
        %417 = vperm.xlu0 %416, %v254
        %v418 = vpop.permute.xlu0 %417
        %419 = vset.pattern.permute.xlu0 2
        %420 = vperm.xlu0 %419, %v255
        %v421 = vpop.permute.xlu0 %420
        %422 = vset.pattern.permute.xlu0 2
        %423 = vperm.xlu0 %422, %v256
        %v424 = vpop.permute.xlu0 %423
        %425 = vset.pattern.permute.xlu0 2
        %426 = vperm.xlu0 %425, %v257
        %v427 = vpop.permute.xlu0 %426
        %428 = vset.pattern.permute.xlu0 2
        %429 = vperm.xlu0 %428, %v258
        %v430 = vpop.permute.xlu0 %429
        %431 = vset.pattern.permute.xlu0 2
        %432 = vperm.xlu0 %431, %v259
        %v433 = vpop.permute.xlu0 %432
        %434 = vset.pattern.permute.xlu0 2
        %435 = vperm.xlu0 %434, %v260
        %v436 = vpop.permute.xlu0 %435
        %437 = vset.pattern.permute.xlu0 2
        %438 = vperm.xlu0 %437, %v261
        %v439 = vpop.permute.xlu0 %438
        %440 = vset.pattern.permute.xlu0 2
        %441 = vperm.xlu0 %440, %v262
        %v442 = vpop.permute.xlu0 %441
        %443 = vset.pattern.permute.xlu0 2
        %444 = vperm.xlu0 %443, %v263
        %v445 = vpop.permute.xlu0 %444
        %446 = vset.pattern.permute.xlu0 2
        %447 = vperm.xlu0 %446, %v264
        %v448 = vpop.permute.xlu0 %447
        %449 = vset.pattern.permute.xlu0 2
        %450 = vperm.xlu0 %449, %v265
        %v451 = vpop.permute.xlu0 %450
        %452 = vset.pattern.permute.xlu0 2
        %453 = vperm.xlu0 %452, %v266
        %v454 = vpop.permute.xlu0 %453
        %455 = vset.pattern.permute.xlu0 2
        %456 = vperm.xlu0 %455, %v267
        %v457 = vpop.permute.xlu0 %456
        %458 = vset.pattern.permute.xlu0 2
        %459 = vperm.xlu0 %458, %v268
        %v460 = vpop.permute.xlu0 %459
        %461 = vset.pattern.permute.xlu0 2
        %462 = vperm.xlu0 %461, %v269
        %v463 = vpop.permute.xlu0 %462
        %vm464 = vcmp.eq.s32.totalorder %v271, %v418
        %vm465 = vcmp.eq.s32.totalorder %v271, %v421
        %vm466 = vcmp.eq.s32.totalorder %v271, %v424
        %vm467 = vcmp.eq.s32.totalorder %v271, %v427
        %vm468 = vcmp.eq.s32.totalorder %v271, %v430
        %vm469 = vcmp.eq.s32.totalorder %v271, %v433
        %vm470 = vcmp.eq.s32.totalorder %v271, %v436
        %vm471 = vcmp.eq.s32.totalorder %v271, %v439
        %vm472 = vcmp.eq.s32.totalorder %v271, %v442
        %vm473 = vcmp.eq.s32.totalorder %v271, %v445
        %vm474 = vcmp.eq.s32.totalorder %v271, %v448
        %vm475 = vcmp.eq.s32.totalorder %v271, %v451
        %vm476 = vcmp.eq.s32.totalorder %v271, %v454
        %vm477 = vcmp.eq.s32.totalorder %v271, %v457
        %vm478 = vcmp.eq.s32.totalorder %v271, %v460
        %vm479 = vcmp.eq.s32.totalorder %v271, %v463
        %vm480 = vmor %vm400, %vm464
        %vm481 = vmor %vm401, %vm465
        %vm482 = vmor %vm402, %vm466
        %vm483 = vmor %vm403, %vm467
        %vm484 = vmor %vm404, %vm468
        %vm485 = vmor %vm405, %vm469
        %vm486 = vmor %vm406, %vm470
        %vm487 = vmor %vm407, %vm471
        %vm488 = vmor %vm408, %vm472
        %vm489 = vmor %vm409, %vm473
        %vm490 = vmor %vm410, %vm474
        %vm491 = vmor %vm411, %vm475
        %vm492 = vmor %vm412, %vm476
        %vm493 = vmor %vm413, %vm477
        %vm494 = vmor %vm414, %vm478
        %vm495 = vmor %vm415, %vm479
        %496 = vset.pattern.permute.xlu0 3
        %497 = vperm.xlu0 %496, %v254
        %v498 = vpop.permute.xlu0 %497
        %499 = vset.pattern.permute.xlu0 3
        %500 = vperm.xlu0 %499, %v255
        %v501 = vpop.permute.xlu0 %500
        %502 = vset.pattern.permute.xlu0 3
        %503 = vperm.xlu0 %502, %v256
        %v504 = vpop.permute.xlu0 %503
        %505 = vset.pattern.permute.xlu0 3
        %506 = vperm.xlu0 %505, %v257
        %v507 = vpop.permute.xlu0 %506
        %508 = vset.pattern.permute.xlu0 3
        %509 = vperm.xlu0 %508, %v258
        %v510 = vpop.permute.xlu0 %509
        %511 = vset.pattern.permute.xlu0 3
        %512 = vperm.xlu0 %511, %v259
        %v513 = vpop.permute.xlu0 %512
        %514 = vset.pattern.permute.xlu0 3
        %515 = vperm.xlu0 %514, %v260
        %v516 = vpop.permute.xlu0 %515
        %517 = vset.pattern.permute.xlu0 3
        %518 = vperm.xlu0 %517, %v261
        %v519 = vpop.permute.xlu0 %518
        %520 = vset.pattern.permute.xlu0 3
        %521 = vperm.xlu0 %520, %v262
        %v522 = vpop.permute.xlu0 %521
        %523 = vset.pattern.permute.xlu0 3
        %524 = vperm.xlu0 %523, %v263
        %v525 = vpop.permute.xlu0 %524
        %526 = vset.pattern.permute.xlu0 3
        %527 = vperm.xlu0 %526, %v264
        %v528 = vpop.permute.xlu0 %527
        %529 = vset.pattern.permute.xlu0 3
        %530 = vperm.xlu0 %529, %v265
        %v531 = vpop.permute.xlu0 %530
        %532 = vset.pattern.permute.xlu0 3
        %533 = vperm.xlu0 %532, %v266
        %v534 = vpop.permute.xlu0 %533
        %535 = vset.pattern.permute.xlu0 3
        %536 = vperm.xlu0 %535, %v267
        %v537 = vpop.permute.xlu0 %536
        %538 = vset.pattern.permute.xlu0 3
        %539 = vperm.xlu0 %538, %v268
        %v540 = vpop.permute.xlu0 %539
        %541 = vset.pattern.permute.xlu0 3
        %542 = vperm.xlu0 %541, %v269
        %v543 = vpop.permute.xlu0 %542
        %vm544 = vcmp.eq.s32.totalorder %v271, %v498
        %vm545 = vcmp.eq.s32.totalorder %v271, %v501
        %vm546 = vcmp.eq.s32.totalorder %v271, %v504
        %vm547 = vcmp.eq.s32.totalorder %v271, %v507
        %vm548 = vcmp.eq.s32.totalorder %v271, %v510
        %vm549 = vcmp.eq.s32.totalorder %v271, %v513
        %vm550 = vcmp.eq.s32.totalorder %v271, %v516
        %vm551 = vcmp.eq.s32.totalorder %v271, %v519
        %vm552 = vcmp.eq.s32.totalorder %v271, %v522
        %vm553 = vcmp.eq.s32.totalorder %v271, %v525
        %vm554 = vcmp.eq.s32.totalorder %v271, %v528
        %vm555 = vcmp.eq.s32.totalorder %v271, %v531
        %vm556 = vcmp.eq.s32.totalorder %v271, %v534
        %vm557 = vcmp.eq.s32.totalorder %v271, %v537
        %vm558 = vcmp.eq.s32.totalorder %v271, %v540
        %vm559 = vcmp.eq.s32.totalorder %v271, %v543
        %vm560 = vmor %vm480, %vm544
        %vm561 = vmor %vm481, %vm545
        %vm562 = vmor %vm482, %vm546
        %vm563 = vmor %vm483, %vm547
        %vm564 = vmor %vm484, %vm548
        %vm565 = vmor %vm485, %vm549
        %vm566 = vmor %vm486, %vm550
        %vm567 = vmor %vm487, %vm551
        %vm568 = vmor %vm488, %vm552
        %vm569 = vmor %vm489, %vm553
        %vm570 = vmor %vm490, %vm554
        %vm571 = vmor %vm491, %vm555
        %vm572 = vmor %vm492, %vm556
        %vm573 = vmor %vm493, %vm557
        %vm574 = vmor %vm494, %vm558
        %vm575 = vmor %vm495, %vm559
        %576 = vset.pattern.permute.xlu0 4
        %577 = vperm.xlu0 %576, %v254
        %v578 = vpop.permute.xlu0 %577
        %579 = vset.pattern.permute.xlu0 4
        %580 = vperm.xlu0 %579, %v255
        %v581 = vpop.permute.xlu0 %580
        %582 = vset.pattern.permute.xlu0 4
        %583 = vperm.xlu0 %582, %v256
        %v584 = vpop.permute.xlu0 %583
        %585 = vset.pattern.permute.xlu0 4
        %586 = vperm.xlu0 %585, %v257
        %v587 = vpop.permute.xlu0 %586
        %588 = vset.pattern.permute.xlu0 4
        %589 = vperm.xlu0 %588, %v258
        %v590 = vpop.permute.xlu0 %589
        %591 = vset.pattern.permute.xlu0 4
        %592 = vperm.xlu0 %591, %v259
        %v593 = vpop.permute.xlu0 %592
        %594 = vset.pattern.permute.xlu0 4
        %595 = vperm.xlu0 %594, %v260
        %v596 = vpop.permute.xlu0 %595
        %597 = vset.pattern.permute.xlu0 4
        %598 = vperm.xlu0 %597, %v261
        %v599 = vpop.permute.xlu0 %598
        %600 = vset.pattern.permute.xlu0 4
        %601 = vperm.xlu0 %600, %v262
        %v602 = vpop.permute.xlu0 %601
        %603 = vset.pattern.permute.xlu0 4
        %604 = vperm.xlu0 %603, %v263
        %v605 = vpop.permute.xlu0 %604
        %606 = vset.pattern.permute.xlu0 4
        %607 = vperm.xlu0 %606, %v264
        %v608 = vpop.permute.xlu0 %607
        %609 = vset.pattern.permute.xlu0 4
        %610 = vperm.xlu0 %609, %v265
        %v611 = vpop.permute.xlu0 %610
        %612 = vset.pattern.permute.xlu0 4
        %613 = vperm.xlu0 %612, %v266
        %v614 = vpop.permute.xlu0 %613
        %615 = vset.pattern.permute.xlu0 4
        %616 = vperm.xlu0 %615, %v267
        %v617 = vpop.permute.xlu0 %616
        %618 = vset.pattern.permute.xlu0 4
        %619 = vperm.xlu0 %618, %v268
        %v620 = vpop.permute.xlu0 %619
        %621 = vset.pattern.permute.xlu0 4
        %622 = vperm.xlu0 %621, %v269
        %v623 = vpop.permute.xlu0 %622
        %vm624 = vcmp.eq.s32.totalorder %v271, %v578
        %vm625 = vcmp.eq.s32.totalorder %v271, %v581
        %vm626 = vcmp.eq.s32.totalorder %v271, %v584
        %vm627 = vcmp.eq.s32.totalorder %v271, %v587
        %vm628 = vcmp.eq.s32.totalorder %v271, %v590
        %vm629 = vcmp.eq.s32.totalorder %v271, %v593
        %vm630 = vcmp.eq.s32.totalorder %v271, %v596
        %vm631 = vcmp.eq.s32.totalorder %v271, %v599
        %vm632 = vcmp.eq.s32.totalorder %v271, %v602
        %vm633 = vcmp.eq.s32.totalorder %v271, %v605
        %vm634 = vcmp.eq.s32.totalorder %v271, %v608
        %vm635 = vcmp.eq.s32.totalorder %v271, %v611
        %vm636 = vcmp.eq.s32.totalorder %v271, %v614
        %vm637 = vcmp.eq.s32.totalorder %v271, %v617
        %vm638 = vcmp.eq.s32.totalorder %v271, %v620
        %vm639 = vcmp.eq.s32.totalorder %v271, %v623
        %vm640 = vmor %vm560, %vm624
        %vm641 = vmor %vm561, %vm625
        %vm642 = vmor %vm562, %vm626
        %vm643 = vmor %vm563, %vm627
        %vm644 = vmor %vm564, %vm628
        %vm645 = vmor %vm565, %vm629
        %vm646 = vmor %vm566, %vm630
        %vm647 = vmor %vm567, %vm631
        %vm648 = vmor %vm568, %vm632
        %vm649 = vmor %vm569, %vm633
        %vm650 = vmor %vm570, %vm634
        %vm651 = vmor %vm571, %vm635
        %vm652 = vmor %vm572, %vm636
        %vm653 = vmor %vm573, %vm637
        %vm654 = vmor %vm574, %vm638
        %vm655 = vmor %vm575, %vm639
        %656 = vset.pattern.permute.xlu0 5
        %657 = vperm.xlu0 %656, %v254
        %v658 = vpop.permute.xlu0 %657
        %659 = vset.pattern.permute.xlu0 5
        %660 = vperm.xlu0 %659, %v255
        %v661 = vpop.permute.xlu0 %660
        %662 = vset.pattern.permute.xlu0 5
        %663 = vperm.xlu0 %662, %v256
        %v664 = vpop.permute.xlu0 %663
        %665 = vset.pattern.permute.xlu0 5
        %666 = vperm.xlu0 %665, %v257
        %v667 = vpop.permute.xlu0 %666
        %668 = vset.pattern.permute.xlu0 5
        %669 = vperm.xlu0 %668, %v258
        %v670 = vpop.permute.xlu0 %669
        %671 = vset.pattern.permute.xlu0 5
        %672 = vperm.xlu0 %671, %v259
        %v673 = vpop.permute.xlu0 %672
        %674 = vset.pattern.permute.xlu0 5
        %675 = vperm.xlu0 %674, %v260
        %v676 = vpop.permute.xlu0 %675
        %677 = vset.pattern.permute.xlu0 5
        %678 = vperm.xlu0 %677, %v261
        %v679 = vpop.permute.xlu0 %678
        %680 = vset.pattern.permute.xlu0 5
        %681 = vperm.xlu0 %680, %v262
        %v682 = vpop.permute.xlu0 %681
        %683 = vset.pattern.permute.xlu0 5
        %684 = vperm.xlu0 %683, %v263
        %v685 = vpop.permute.xlu0 %684
        %686 = vset.pattern.permute.xlu0 5
        %687 = vperm.xlu0 %686, %v264
        %v688 = vpop.permute.xlu0 %687
        %689 = vset.pattern.permute.xlu0 5
        %690 = vperm.xlu0 %689, %v265
        %v691 = vpop.permute.xlu0 %690
        %692 = vset.pattern.permute.xlu0 5
        %693 = vperm.xlu0 %692, %v266
        %v694 = vpop.permute.xlu0 %693
        %695 = vset.pattern.permute.xlu0 5
        %696 = vperm.xlu0 %695, %v267
        %v697 = vpop.permute.xlu0 %696
        %698 = vset.pattern.permute.xlu0 5
        %699 = vperm.xlu0 %698, %v268
        %v700 = vpop.permute.xlu0 %699
        %701 = vset.pattern.permute.xlu0 5
        %702 = vperm.xlu0 %701, %v269
        %v703 = vpop.permute.xlu0 %702
        %vm704 = vcmp.eq.s32.totalorder %v271, %v658
        %vm705 = vcmp.eq.s32.totalorder %v271, %v661
        %vm706 = vcmp.eq.s32.totalorder %v271, %v664
        %vm707 = vcmp.eq.s32.totalorder %v271, %v667
        %vm708 = vcmp.eq.s32.totalorder %v271, %v670
        %vm709 = vcmp.eq.s32.totalorder %v271, %v673
        %vm710 = vcmp.eq.s32.totalorder %v271, %v676
        %vm711 = vcmp.eq.s32.totalorder %v271, %v679
        %vm712 = vcmp.eq.s32.totalorder %v271, %v682
        %vm713 = vcmp.eq.s32.totalorder %v271, %v685
        %vm714 = vcmp.eq.s32.totalorder %v271, %v688
        %vm715 = vcmp.eq.s32.totalorder %v271, %v691
        %vm716 = vcmp.eq.s32.totalorder %v271, %v694
        %vm717 = vcmp.eq.s32.totalorder %v271, %v697
        %vm718 = vcmp.eq.s32.totalorder %v271, %v700
        %vm719 = vcmp.eq.s32.totalorder %v271, %v703
        %vm720 = vmor %vm640, %vm704
        %vm721 = vmor %vm641, %vm705
        %vm722 = vmor %vm642, %vm706
        %vm723 = vmor %vm643, %vm707
        %vm724 = vmor %vm644, %vm708
        %vm725 = vmor %vm645, %vm709
        %vm726 = vmor %vm646, %vm710
        %vm727 = vmor %vm647, %vm711
        %vm728 = vmor %vm648, %vm712
        %vm729 = vmor %vm649, %vm713
        %vm730 = vmor %vm650, %vm714
        %vm731 = vmor %vm651, %vm715
        %vm732 = vmor %vm652, %vm716
        %vm733 = vmor %vm653, %vm717
        %vm734 = vmor %vm654, %vm718
        %vm735 = vmor %vm655, %vm719
        %736 = vset.pattern.permute.xlu0 6
        %737 = vperm.xlu0 %736, %v254
        %v738 = vpop.permute.xlu0 %737
        %739 = vset.pattern.permute.xlu0 6
        %740 = vperm.xlu0 %739, %v255
        %v741 = vpop.permute.xlu0 %740
        %742 = vset.pattern.permute.xlu0 6
        %743 = vperm.xlu0 %742, %v256
        %v744 = vpop.permute.xlu0 %743
        %745 = vset.pattern.permute.xlu0 6
        %746 = vperm.xlu0 %745, %v257
        %v747 = vpop.permute.xlu0 %746
        %748 = vset.pattern.permute.xlu0 6
        %749 = vperm.xlu0 %748, %v258
        %v750 = vpop.permute.xlu0 %749
        %751 = vset.pattern.permute.xlu0 6
        %752 = vperm.xlu0 %751, %v259
        %v753 = vpop.permute.xlu0 %752
        %754 = vset.pattern.permute.xlu0 6
        %755 = vperm.xlu0 %754, %v260
        %v756 = vpop.permute.xlu0 %755
        %757 = vset.pattern.permute.xlu0 6
        %758 = vperm.xlu0 %757, %v261
        %v759 = vpop.permute.xlu0 %758
        %760 = vset.pattern.permute.xlu0 6
        %761 = vperm.xlu0 %760, %v262
        %v762 = vpop.permute.xlu0 %761
        %763 = vset.pattern.permute.xlu0 6
        %764 = vperm.xlu0 %763, %v263
        %v765 = vpop.permute.xlu0 %764
        %766 = vset.pattern.permute.xlu0 6
        %767 = vperm.xlu0 %766, %v264
        %v768 = vpop.permute.xlu0 %767
        %769 = vset.pattern.permute.xlu0 6
        %770 = vperm.xlu0 %769, %v265
        %v771 = vpop.permute.xlu0 %770
        %772 = vset.pattern.permute.xlu0 6
        %773 = vperm.xlu0 %772, %v266
        %v774 = vpop.permute.xlu0 %773
        %775 = vset.pattern.permute.xlu0 6
        %776 = vperm.xlu0 %775, %v267
        %v777 = vpop.permute.xlu0 %776
        %778 = vset.pattern.permute.xlu0 6
        %779 = vperm.xlu0 %778, %v268
        %v780 = vpop.permute.xlu0 %779
        %781 = vset.pattern.permute.xlu0 6
        %782 = vperm.xlu0 %781, %v269
        %v783 = vpop.permute.xlu0 %782
        %vm784 = vcmp.eq.s32.totalorder %v271, %v738
        %vm785 = vcmp.eq.s32.totalorder %v271, %v741
        %vm786 = vcmp.eq.s32.totalorder %v271, %v744
        %vm787 = vcmp.eq.s32.totalorder %v271, %v747
        %vm788 = vcmp.eq.s32.totalorder %v271, %v750
        %vm789 = vcmp.eq.s32.totalorder %v271, %v753
        %vm790 = vcmp.eq.s32.totalorder %v271, %v756
        %vm791 = vcmp.eq.s32.totalorder %v271, %v759
        %vm792 = vcmp.eq.s32.totalorder %v271, %v762
        %vm793 = vcmp.eq.s32.totalorder %v271, %v765
        %vm794 = vcmp.eq.s32.totalorder %v271, %v768
        %vm795 = vcmp.eq.s32.totalorder %v271, %v771
        %vm796 = vcmp.eq.s32.totalorder %v271, %v774
        %vm797 = vcmp.eq.s32.totalorder %v271, %v777
        %vm798 = vcmp.eq.s32.totalorder %v271, %v780
        %vm799 = vcmp.eq.s32.totalorder %v271, %v783
        %vm800 = vmor %vm720, %vm784
        %vm801 = vmor %vm721, %vm785
        %vm802 = vmor %vm722, %vm786
        %vm803 = vmor %vm723, %vm787
        %vm804 = vmor %vm724, %vm788
        %vm805 = vmor %vm725, %vm789
        %vm806 = vmor %vm726, %vm790
        %vm807 = vmor %vm727, %vm791
        %vm808 = vmor %vm728, %vm792
        %vm809 = vmor %vm729, %vm793
        %vm810 = vmor %vm730, %vm794
        %vm811 = vmor %vm731, %vm795
        %vm812 = vmor %vm732, %vm796
        %vm813 = vmor %vm733, %vm797
        %vm814 = vmor %vm734, %vm798
        %vm815 = vmor %vm735, %vm799
        %816 = vset.pattern.permute.xlu0 7
        %817 = vperm.xlu0 %816, %v254
        %v818 = vpop.permute.xlu0 %817
        %819 = vset.pattern.permute.xlu0 7
        %820 = vperm.xlu0 %819, %v255
        %v821 = vpop.permute.xlu0 %820
        %822 = vset.pattern.permute.xlu0 7
        %823 = vperm.xlu0 %822, %v256
        %v824 = vpop.permute.xlu0 %823
        %825 = vset.pattern.permute.xlu0 7
        %826 = vperm.xlu0 %825, %v257
        %v827 = vpop.permute.xlu0 %826
        %828 = vset.pattern.permute.xlu0 7
        %829 = vperm.xlu0 %828, %v258
        %v830 = vpop.permute.xlu0 %829
        %831 = vset.pattern.permute.xlu0 7
        %832 = vperm.xlu0 %831, %v259
        %v833 = vpop.permute.xlu0 %832
        %834 = vset.pattern.permute.xlu0 7
        %835 = vperm.xlu0 %834, %v260
        %v836 = vpop.permute.xlu0 %835
        %837 = vset.pattern.permute.xlu0 7
        %838 = vperm.xlu0 %837, %v261
        %v839 = vpop.permute.xlu0 %838
        %840 = vset.pattern.permute.xlu0 7
        %841 = vperm.xlu0 %840, %v262
        %v842 = vpop.permute.xlu0 %841
        %843 = vset.pattern.permute.xlu0 7
        %844 = vperm.xlu0 %843, %v263
        %v845 = vpop.permute.xlu0 %844
        %846 = vset.pattern.permute.xlu0 7
        %847 = vperm.xlu0 %846, %v264
        %v848 = vpop.permute.xlu0 %847
        %849 = vset.pattern.permute.xlu0 7
        %850 = vperm.xlu0 %849, %v265
        %v851 = vpop.permute.xlu0 %850
        %852 = vset.pattern.permute.xlu0 7
        %853 = vperm.xlu0 %852, %v266
        %v854 = vpop.permute.xlu0 %853
        %855 = vset.pattern.permute.xlu0 7
        %856 = vperm.xlu0 %855, %v267
        %v857 = vpop.permute.xlu0 %856
        %858 = vset.pattern.permute.xlu0 7
        %859 = vperm.xlu0 %858, %v268
        %v860 = vpop.permute.xlu0 %859
        %861 = vset.pattern.permute.xlu0 7
        %862 = vperm.xlu0 %861, %v269
        %v863 = vpop.permute.xlu0 %862
        %vm864 = vcmp.eq.s32.totalorder %v271, %v818
        %vm865 = vcmp.eq.s32.totalorder %v271, %v821
        %vm866 = vcmp.eq.s32.totalorder %v271, %v824
        %vm867 = vcmp.eq.s32.totalorder %v271, %v827
        %vm868 = vcmp.eq.s32.totalorder %v271, %v830
        %vm869 = vcmp.eq.s32.totalorder %v271, %v833
        %vm870 = vcmp.eq.s32.totalorder %v271, %v836
        %vm871 = vcmp.eq.s32.totalorder %v271, %v839
        %vm872 = vcmp.eq.s32.totalorder %v271, %v842
        %vm873 = vcmp.eq.s32.totalorder %v271, %v845
        %vm874 = vcmp.eq.s32.totalorder %v271, %v848
        %vm875 = vcmp.eq.s32.totalorder %v271, %v851
        %vm876 = vcmp.eq.s32.totalorder %v271, %v854
        %vm877 = vcmp.eq.s32.totalorder %v271, %v857
        %vm878 = vcmp.eq.s32.totalorder %v271, %v860
        %vm879 = vcmp.eq.s32.totalorder %v271, %v863
        %vm880 = vmor %vm800, %vm864
        %vm881 = vmor %vm801, %vm865
        %vm882 = vmor %vm802, %vm866
        %vm883 = vmor %vm803, %vm867
        %vm884 = vmor %vm804, %vm868
        %vm885 = vmor %vm805, %vm869
        %vm886 = vmor %vm806, %vm870
        %vm887 = vmor %vm807, %vm871
        %vm888 = vmor %vm808, %vm872
        %vm889 = vmor %vm809, %vm873
        %vm890 = vmor %vm810, %vm874
        %vm891 = vmor %vm811, %vm875
        %vm892 = vmor %vm812, %vm876
        %vm893 = vmor %vm813, %vm877
        %vm894 = vmor %vm814, %vm878
        %vm895 = vmor %vm815, %vm879
        %v896 = vsel %vm880, 1, 0
        %v897 = vsel %vm881, 1, 0
        %v898 = vsel %vm882, 1, 0
        %v899 = vsel %vm883, 1, 0
        %v900 = vsel %vm884, 1, 0
        %v901 = vsel %vm885, 1, 0
        %v902 = vsel %vm886, 1, 0
        %v903 = vsel %vm887, 1, 0
        %v904 = vsel %vm888, 1, 0
        %v905 = vsel %vm889, 1, 0
        %v906 = vsel %vm890, 1, 0
        %v907 = vsel %vm891, 1, 0
        %v908 = vsel %vm892, 1, 0
        %v909 = vsel %vm893, 1, 0
        %v910 = vsel %vm894, 1, 0
        %v911 = vsel %vm895, 1, 0
        %v912 = vcvt.s32.f32 %v896
        %v913 = vcvt.s32.f32 %v897
        %v914 = vcvt.s32.f32 %v898
        %v915 = vcvt.s32.f32 %v899
        %v916 = vcvt.s32.f32 %v900
        %v917 = vcvt.s32.f32 %v901
        %v918 = vcvt.s32.f32 %v902
        %v919 = vcvt.s32.f32 %v903
        %v920 = vcvt.s32.f32 %v904
        %v921 = vcvt.s32.f32 %v905
        %v922 = vcvt.s32.f32 %v906
        %v923 = vcvt.s32.f32 %v907
        %v924 = vcvt.s32.f32 %v908
        %v925 = vcvt.s32.f32 %v909
        %v926 = vcvt.s32.f32 %v910
        %v927 = vcvt.s32.f32 %v911
        %v928 = vpack.c.bf16 %v913, %v912
        %v929 = vpack.c.bf16 %v915, %v914
        %v930 = vpack.c.bf16 %v917, %v916
        %v931 = vpack.c.bf16 %v919, %v918
        %v932 = vpack.c.bf16 %v921, %v920
        %v933 = vpack.c.bf16 %v923, %v922
        %v934 = vpack.c.bf16 %v925, %v924
        %v935 = vpack.c.bf16 %v927, %v926
        %v936 = vld [vmem:[%s1] sm:$0xf]
        %v937 = vld [vmem:[%s1 + $0x4] sm:$0xf]
        %v938 = vld [vmem:[%s1 + $0x8] sm:$0xf]
        %v939 = vld [vmem:[%s1 + $0xc] sm:$0xf]
        %v940 = vld [vmem:[%s1 + $0x10] sm:$0xf]
        %v941 = vld [vmem:[%s1 + $0x14] sm:$0xf]
        %v942 = vld [vmem:[%s1 + $0x18] sm:$0xf]
        %v943 = vld [vmem:[%s1 + $0x1c] sm:$0xf]
        %v944 = vld [vmem:[%s1 + $0x20] sm:$0xf]
        %v945 = vld [vmem:[%s1 + $0x24] sm:$0xf]
        %v946 = vld [vmem:[%s1 + $0x28] sm:$0xf]
        %v947 = vld [vmem:[%s1 + $0x2c] sm:$0xf]
        %v948 = vld [vmem:[%s1 + $0x30] sm:$0xf]
        %v949 = vld [vmem:[%s1 + $0x34] sm:$0xf]
        %v950 = vld [vmem:[%s1 + $0x38] sm:$0xf]
        %v951 = vld [vmem:[%s1 + $0x3c] sm:$0xf]
        %v952 = vld [vmem:[%s2] sm:$0xf]
        %v953 = vld [vmem:[%s2 + $0x4] sm:$0xf]
        %v954 = vld [vmem:[%s2 + $0x8] sm:$0xf]
        %v955 = vld [vmem:[%s2 + $0xc] sm:$0xf]
        %v956 = vld [vmem:[%s2 + $0x10] sm:$0xf]
        %v957 = vld [vmem:[%s2 + $0x14] sm:$0xf]
        %v958 = vld [vmem:[%s2 + $0x18] sm:$0xf]
        %v959 = vld [vmem:[%s2 + $0x1c] sm:$0xf]
        %v960 = vld [vmem:[%s2 + $0x20] sm:$0xf]
        %v961 = vld [vmem:[%s2 + $0x24] sm:$0xf]
        %v962 = vld [vmem:[%s2 + $0x28] sm:$0xf]
        %v963 = vld [vmem:[%s2 + $0x2c] sm:$0xf]
        %v964 = vld [vmem:[%s2 + $0x30] sm:$0xf]
        %v965 = vld [vmem:[%s2 + $0x34] sm:$0xf]
        %v966 = vld [vmem:[%s2 + $0x38] sm:$0xf]
        %v967 = vld [vmem:[%s2 + $0x3c] sm:$0xf]
        %v984 = vunpack.c.l.b16 %v952
        %v985 = vunpack.c.l.b16 %v953
        %v986 = vunpack.c.l.b16 %v954
        %v987 = vunpack.c.l.b16 %v955
        %v988 = vunpack.c.l.b16 %v956
        %v989 = vunpack.c.l.b16 %v957
        %v990 = vunpack.c.l.b16 %v958
        %v991 = vunpack.c.l.b16 %v959
        %v992 = vunpack.c.l.b16 %v960
        %v993 = vunpack.c.l.b16 %v961
        %v994 = vunpack.c.l.b16 %v962
        %v995 = vunpack.c.l.b16 %v963
        %v996 = vunpack.c.l.b16 %v964
        %v997 = vunpack.c.l.b16 %v965
        %v998 = vunpack.c.l.b16 %v966
        %v999 = vunpack.c.l.b16 %v967
        %v1000 = vpack.c.b16 %v985, %v984
        %v1001 = vpack.c.b16 %v987, %v986
        %v1002 = vpack.c.b16 %v989, %v988
        %v1003 = vpack.c.b16 %v991, %v990
        %v1004 = vpack.c.b16 %v993, %v992
        %v1005 = vpack.c.b16 %v995, %v994
        %v1006 = vpack.c.b16 %v997, %v996
        %v1007 = vpack.c.b16 %v999, %v998
        %1016 = vmatprep.subr.bf16.mxu0 0
        %1017 = vmatpush1.bf16.msra.mxu0 %v1007
        %1018 = vmatprep.subr.bf16.mxu0 0
        %1019 = vmatpush1.bf16.msra.mxu0 %v1006
        %1020 = vmatprep.subr.bf16.mxu0 0
        %1021 = vmatpush1.bf16.msra.mxu0 %v1005
        %1022 = vmatprep.subr.bf16.mxu0 0
        %1023 = vmatpush1.bf16.msra.mxu0 %v1004
        %1024 = vmatprep.subr.bf16.mxu0 0
        %1025 = vmatpush1.bf16.msra.mxu0 %v1003
        %1026 = vmatprep.subr.bf16.mxu0 0
        %1027 = vmatpush1.bf16.msra.mxu0 %v1002
        %1028 = vmatprep.subr.bf16.mxu0 0
        %1029 = vmatpush1.bf16.msra.mxu0 %v1001
        %1030 = vmatprep.subr.bf16.mxu0 0
        %1031 = vmatpush1.bf16.msra.mxu0 %v1000
        %1032 = vmatprep.subr.bf16.mxu0 0
        %1033 = vmatpush2.bf16.msra.mxu0 0
        %1034 = vmatprep.subr.bf16.mxu0 0
        %1035 = vmatpush2.bf16.msra.mxu0 0
        %1036 = vmatprep.subr.bf16.mxu0 0
        %1037 = vmatpush2.bf16.msra.mxu0 0
        %1038 = vmatprep.subr.bf16.mxu0 0
        %1039 = vmatpush2.bf16.msra.mxu0 0
        %1040 = vmatprep.subr.bf16.mxu0 0
        %1041 = vmatpush2.bf16.msra.mxu0 0
        %1042 = vmatprep.subr.bf16.mxu0 0
        %1043 = vmatpush2.bf16.msra.mxu0 0
        %1044 = vmatprep.subr.bf16.mxu0 0
        %1045 = vmatpush2.bf16.msra.mxu0 0
        %1046 = vmatprep.subr.bf16.mxu0 0
        %1047 = vmatpush2.bf16.msra.mxu0 0
        %1048 = vmatprep.mubr.bf16.mxu0 0
        %1049 = vmatmul.mubr.bf16.gmra.mxu0 %v928
        %v1050 = vpop.f32.mrf.mxu0
        %v1051 = vadd.f32 0.0, %v1050
        %v1052 = vpop.f32.mrf.mxu0
        %v1053 = vpop.f32.mrf.mxu0
        %v1054 = vadd.f32 0.0, %v1053
        %v1055 = vpop.f32.mrf.mxu0
        %1056 = vmatprep.mubr.bf16.mxu0 0
        %1057 = vmatmul.mubr.bf16.gmra.mxu0 %v929
        %v1058 = vpop.f32.mrf.mxu0
        %v1059 = vadd.f32 0.0, %v1058
        %v1060 = vpop.f32.mrf.mxu0
        %v1061 = vpop.f32.mrf.mxu0
        %v1062 = vadd.f32 0.0, %v1061
        %v1063 = vpop.f32.mrf.mxu0
        %1064 = vmatprep.mubr.bf16.mxu0 0
        %1065 = vmatmul.mubr.bf16.gmra.mxu0 %v930
        %v1066 = vpop.f32.mrf.mxu0
        %v1067 = vadd.f32 0.0, %v1066
        %v1068 = vpop.f32.mrf.mxu0
        %v1069 = vpop.f32.mrf.mxu0
        %v1070 = vadd.f32 0.0, %v1069
        %v1071 = vpop.f32.mrf.mxu0
        %1072 = vmatprep.mubr.bf16.mxu0 0
        %1073 = vmatmul.mubr.bf16.gmra.mxu0 %v931
        %v1074 = vpop.f32.mrf.mxu0
        %v1075 = vadd.f32 0.0, %v1074
        %v1076 = vpop.f32.mrf.mxu0
        %v1077 = vpop.f32.mrf.mxu0
        %v1078 = vadd.f32 0.0, %v1077
        %v1079 = vpop.f32.mrf.mxu0
        %1080 = vmatprep.mubr.bf16.mxu0 0
        %1081 = vmatmul.mubr.bf16.gmra.mxu0 %v932
        %v1082 = vpop.f32.mrf.mxu0
        %v1083 = vadd.f32 0.0, %v1082
        %v1084 = vpop.f32.mrf.mxu0
        %v1085 = vpop.f32.mrf.mxu0
        %v1086 = vadd.f32 0.0, %v1085
        %v1087 = vpop.f32.mrf.mxu0
        %1088 = vmatprep.mubr.bf16.mxu0 0
        %1089 = vmatmul.mubr.bf16.gmra.mxu0 %v933
        %v1090 = vpop.f32.mrf.mxu0
        %v1091 = vadd.f32 0.0, %v1090
        %v1092 = vpop.f32.mrf.mxu0
        %v1093 = vpop.f32.mrf.mxu0
        %v1094 = vadd.f32 0.0, %v1093
        %v1095 = vpop.f32.mrf.mxu0
        %1096 = vmatprep.mubr.bf16.mxu0 0
        %1097 = vmatmul.mubr.bf16.gmra.mxu0 %v934
        %v1098 = vpop.f32.mrf.mxu0
        %v1099 = vadd.f32 0.0, %v1098
        %v1100 = vpop.f32.mrf.mxu0
        %v1101 = vpop.f32.mrf.mxu0
        %v1102 = vadd.f32 0.0, %v1101
        %v1103 = vpop.f32.mrf.mxu0
        %1104 = vmatprep.mubr.bf16.mxu0 0
        %1105 = vmatmul.mubr.bf16.gmra.mxu0 %v935
        %v1106 = vpop.f32.mrf.mxu0
        %v1107 = vadd.f32 0.0, %v1106
        %v1108 = vpop.f32.mrf.mxu0
        %v1109 = vpop.f32.mrf.mxu0
        %v1110 = vadd.f32 0.0, %v1109
        %v1111 = vpop.f32.mrf.mxu0
        %1112 = vdwg.mxu0
        %v1129 = vunpack.c.l.b16 %v936
        %v1130 = vunpack.c.l.b16 %v937
        %v1131 = vunpack.c.l.b16 %v938
        %v1132 = vunpack.c.l.b16 %v939
        %v1133 = vunpack.c.l.b16 %v940
        %v1134 = vunpack.c.l.b16 %v941
        %v1135 = vunpack.c.l.b16 %v942
        %v1136 = vunpack.c.l.b16 %v943
        %v1137 = vunpack.c.l.b16 %v944
        %v1138 = vunpack.c.l.b16 %v945
        %v1139 = vunpack.c.l.b16 %v946
        %v1140 = vunpack.c.l.b16 %v947
        %v1141 = vunpack.c.l.b16 %v948
        %v1142 = vunpack.c.l.b16 %v949
        %v1143 = vunpack.c.l.b16 %v950
        %v1144 = vunpack.c.l.b16 %v951
        %v1145 = vpack.c.b16 %v1130, %v1129
        %v1146 = vpack.c.b16 %v1132, %v1131
        %v1147 = vpack.c.b16 %v1134, %v1133
        %v1148 = vpack.c.b16 %v1136, %v1135
        %v1149 = vpack.c.b16 %v1138, %v1137
        %v1150 = vpack.c.b16 %v1140, %v1139
        %v1151 = vpack.c.b16 %v1142, %v1141
        %v1152 = vpack.c.b16 %v1144, %v1143
        %1161 = vmatprep.subr.bf16.mxu0 0
        %1162 = vmatpush1.bf16.msra.mxu0 %v1152
        %1163 = vmatprep.subr.bf16.mxu0 0
        %1164 = vmatpush1.bf16.msra.mxu0 %v1151
        %1165 = vmatprep.subr.bf16.mxu0 0
        %1166 = vmatpush1.bf16.msra.mxu0 %v1150
        %1167 = vmatprep.subr.bf16.mxu0 0
        %1168 = vmatpush1.bf16.msra.mxu0 %v1149
        %1169 = vmatprep.subr.bf16.mxu0 0
        %1170 = vmatpush1.bf16.msra.mxu0 %v1148
        %1171 = vmatprep.subr.bf16.mxu0 0
        %1172 = vmatpush1.bf16.msra.mxu0 %v1147
        %1173 = vmatprep.subr.bf16.mxu0 0
        %1174 = vmatpush1.bf16.msra.mxu0 %v1146
        %1175 = vmatprep.subr.bf16.mxu0 0
        %1176 = vmatpush1.bf16.msra.mxu0 %v1145
        %1177 = vmatprep.subr.bf16.mxu0 0
        %1178 = vmatpush2.bf16.msra.mxu0 0
        %1179 = vmatprep.subr.bf16.mxu0 0
        %1180 = vmatpush2.bf16.msra.mxu0 0
        %1181 = vmatprep.subr.bf16.mxu0 0
        %1182 = vmatpush2.bf16.msra.mxu0 0
        %1183 = vmatprep.subr.bf16.mxu0 0
        %1184 = vmatpush2.bf16.msra.mxu0 0
        %1185 = vmatprep.subr.bf16.mxu0 0
        %1186 = vmatpush2.bf16.msra.mxu0 0
        %1187 = vmatprep.subr.bf16.mxu0 0
        %1188 = vmatpush2.bf16.msra.mxu0 0
        %1189 = vmatprep.subr.bf16.mxu0 0
        %1190 = vmatpush2.bf16.msra.mxu0 0
        %1191 = vmatprep.subr.bf16.mxu0 0
        %1192 = vmatpush2.bf16.msra.mxu0 0
        %1193 = vmatprep.mubr.bf16.mxu0 0
        %1194 = vmatmul.mubr.bf16.gmra.mxu0 %v928
        %v1195 = vpop.f32.mrf.mxu0
        %v1196 = vadd.f32 %v1051, %v1195
        %v1197 = vpop.f32.mrf.mxu0
        %v1198 = vpop.f32.mrf.mxu0
        %v1199 = vadd.f32 %v1054, %v1198
        %v1200 = vpop.f32.mrf.mxu0
        %1201 = vmatprep.mubr.bf16.mxu0 0
        %1202 = vmatmul.mubr.bf16.gmra.mxu0 %v929
        %v1203 = vpop.f32.mrf.mxu0
        %v1204 = vadd.f32 %v1059, %v1203
        %v1205 = vpop.f32.mrf.mxu0
        %v1206 = vpop.f32.mrf.mxu0
        %v1207 = vadd.f32 %v1062, %v1206
        %v1208 = vpop.f32.mrf.mxu0
        %1209 = vmatprep.mubr.bf16.mxu0 0
        %1210 = vmatmul.mubr.bf16.gmra.mxu0 %v930
        %v1211 = vpop.f32.mrf.mxu0
        %v1212 = vadd.f32 %v1067, %v1211
        %v1213 = vpop.f32.mrf.mxu0
        %v1214 = vpop.f32.mrf.mxu0
        %v1215 = vadd.f32 %v1070, %v1214
        %v1216 = vpop.f32.mrf.mxu0
        %1217 = vmatprep.mubr.bf16.mxu0 0
        %1218 = vmatmul.mubr.bf16.gmra.mxu0 %v931
        %v1219 = vpop.f32.mrf.mxu0
        %v1220 = vadd.f32 %v1075, %v1219
        %v1221 = vpop.f32.mrf.mxu0
        %v1222 = vpop.f32.mrf.mxu0
        %v1223 = vadd.f32 %v1078, %v1222
        %v1224 = vpop.f32.mrf.mxu0
        %1225 = vmatprep.mubr.bf16.mxu0 0
        %1226 = vmatmul.mubr.bf16.gmra.mxu0 %v932
        %v1227 = vpop.f32.mrf.mxu0
        %v1228 = vadd.f32 %v1083, %v1227
        %v1229 = vpop.f32.mrf.mxu0
        %v1230 = vpop.f32.mrf.mxu0
        %v1231 = vadd.f32 %v1086, %v1230
        %v1232 = vpop.f32.mrf.mxu0
        %1233 = vmatprep.mubr.bf16.mxu0 0
        %1234 = vmatmul.mubr.bf16.gmra.mxu0 %v933
        %v1235 = vpop.f32.mrf.mxu0
        %v1236 = vadd.f32 %v1091, %v1235
        %v1237 = vpop.f32.mrf.mxu0
        %v1238 = vpop.f32.mrf.mxu0
        %v1239 = vadd.f32 %v1094, %v1238
        %v1240 = vpop.f32.mrf.mxu0
        %1241 = vmatprep.mubr.bf16.mxu0 0
        %1242 = vmatmul.mubr.bf16.gmra.mxu0 %v934
        %v1243 = vpop.f32.mrf.mxu0
        %v1244 = vadd.f32 %v1099, %v1243
        %v1245 = vpop.f32.mrf.mxu0
        %v1246 = vpop.f32.mrf.mxu0
        %v1247 = vadd.f32 %v1102, %v1246
        %v1248 = vpop.f32.mrf.mxu0
        %1249 = vmatprep.mubr.bf16.mxu0 0
        %1250 = vmatmul.mubr.bf16.gmra.mxu0 %v935
        %v1251 = vpop.f32.mrf.mxu0
        %v1252 = vadd.f32 %v1107, %v1251
        %v1253 = vpop.f32.mrf.mxu0
        %v1254 = vpop.f32.mrf.mxu0
        %v1255 = vadd.f32 %v1110, %v1254
        %v1256 = vpop.f32.mrf.mxu0
        %1257 = vdwg.mxu0
        %v1258 = vtanh.pop %v1196
        %v1259 = vtanh.pop %v1199
        %v1260 = vtanh.pop %v1204
        %v1261 = vtanh.pop %v1207
        %v1262 = vtanh.pop %v1212
        %v1263 = vtanh.pop %v1215
        %v1264 = vtanh.pop %v1220
        %v1265 = vtanh.pop %v1223
        %v1266 = vtanh.pop %v1228
        %v1267 = vtanh.pop %v1231
        %v1268 = vtanh.pop %v1236
        %v1269 = vtanh.pop %v1239
        %v1270 = vtanh.pop %v1244
        %v1271 = vtanh.pop %v1247
        %v1272 = vtanh.pop %v1252
        %v1273 = vtanh.pop %v1255
        %v1274 = vpack.c.bf16 %v1259, %v1258
        %v1275 = vpack.c.bf16 %v1261, %v1260
        %v1276 = vpack.c.bf16 %v1263, %v1262
        %v1277 = vpack.c.bf16 %v1265, %v1264
        %v1278 = vpack.c.bf16 %v1267, %v1266
        %v1279 = vpack.c.bf16 %v1269, %v1268
        %v1280 = vpack.c.bf16 %v1271, %v1270
        %v1281 = vpack.c.bf16 %v1273, %v1272
        %v1282 = vunpack.c.l.bf16 %v1274
        %v1283 = vunpack.c.h.bf16 %v1274
        %v1284 = vunpack.c.l.bf16 %v1275
        %v1285 = vunpack.c.h.bf16 %v1275
        %v1286 = vunpack.c.l.bf16 %v1276
        %v1287 = vunpack.c.h.bf16 %v1276
        %v1288 = vunpack.c.l.bf16 %v1277
        %v1289 = vunpack.c.h.bf16 %v1277
        %v1290 = vunpack.c.l.bf16 %v1278
        %v1291 = vunpack.c.h.bf16 %v1278
        %v1292 = vunpack.c.l.bf16 %v1279
        %v1293 = vunpack.c.h.bf16 %v1279
        %v1294 = vunpack.c.l.bf16 %v1280
        %v1295 = vunpack.c.h.bf16 %v1280
        %v1296 = vunpack.c.l.bf16 %v1281
        %v1297 = vunpack.c.h.bf16 %v1281
        %v1298 = vsub.f32 %v1258, %v1282
        %v1299 = vsub.f32 %v1259, %v1283
        %v1300 = vsub.f32 %v1260, %v1284
        %v1301 = vsub.f32 %v1261, %v1285
        %v1302 = vsub.f32 %v1262, %v1286
        %v1303 = vsub.f32 %v1263, %v1287
        %v1304 = vsub.f32 %v1264, %v1288
        %v1305 = vsub.f32 %v1265, %v1289
        %v1306 = vsub.f32 %v1266, %v1290
        %v1307 = vsub.f32 %v1267, %v1291
        %v1308 = vsub.f32 %v1268, %v1292
        %v1309 = vsub.f32 %v1269, %v1293
        %v1310 = vsub.f32 %v1270, %v1294
        %v1311 = vsub.f32 %v1271, %v1295
        %v1312 = vsub.f32 %v1272, %v1296
        %v1313 = vsub.f32 %v1273, %v1297
        %v1314 = vpack.c.bf16 %v1299, %v1298
        %v1315 = vpack.c.bf16 %v1301, %v1300
        %v1316 = vpack.c.bf16 %v1303, %v1302
        %v1317 = vpack.c.bf16 %v1305, %v1304
        %v1318 = vpack.c.bf16 %v1307, %v1306
        %v1319 = vpack.c.bf16 %v1309, %v1308
        %v1320 = vpack.c.bf16 %v1311, %v1310
        %v1321 = vpack.c.bf16 %v1313, %v1312
        %v1322 = vld [vmem:[%s3] sm:$0xf]
        %v1323 = vld [vmem:[%s3 + $0x4] sm:$0xf]
        %v1324 = vld [vmem:[%s3 + $0x8] sm:$0xf]
        %v1325 = vld [vmem:[%s3 + $0xc] sm:$0xf]
        %v1326 = vld [vmem:[%s4] sm:$0xf]
        %v1327 = vld [vmem:[%s4 + $0x4] sm:$0xf]
        %v1328 = vld [vmem:[%s4 + $0x8] sm:$0xf]
        %v1329 = vld [vmem:[%s4 + $0xc] sm:$0xf]
        %v1334 = vunpack.c.l.b16 %v1322
        %v1335 = vunpack.c.l.b16 %v1323
        %v1336 = vunpack.c.l.b16 %v1324
        %v1337 = vunpack.c.l.b16 %v1325
        %v1338 = vpack.c.b16 %v1335, %v1334
        %v1339 = vpack.c.b16 %v1337, %v1336
        %vm1342 = vcmask 261120
        %v1344 = vsel %vm1342, %v1314, 0
        %v1347 = vsel %vm1342, %v1315, 0
        %v1350 = vsel %vm1342, %v1316, 0
        %v1353 = vsel %vm1342, %v1317, 0
        %v1356 = vsel %vm1342, %v1318, 0
        %v1359 = vsel %vm1342, %v1319, 0
        %v1362 = vsel %vm1342, %v1320, 0
        %v1365 = vsel %vm1342, %v1321, 0
        %1367 = vmatprep.subr.bf16.mxu0 0
        %1368 = vmatpush1.bf16.msra.mxu0 0
        %1369 = vmatprep.subr.bf16.mxu0 0
        %1370 = vmatpush1.bf16.msra.mxu0 0
        %1371 = vmatprep.subr.bf16.mxu0 0
        %1372 = vmatpush1.bf16.msra.mxu0 0
        %1373 = vmatprep.subr.bf16.mxu0 0
        %1374 = vmatpush1.bf16.msra.mxu0 0
        %1375 = vmatprep.subr.bf16.mxu0 0
        %1376 = vmatpush1.bf16.msra.mxu0 0
        %1377 = vmatprep.subr.bf16.mxu0 0
        %1378 = vmatpush1.bf16.msra.mxu0 0
        %1379 = vmatprep.subr.bf16.mxu0 0
        %1380 = vmatpush1.bf16.msra.mxu0 %v1339
        %1381 = vmatprep.subr.bf16.mxu0 0
        %1382 = vmatpush1.bf16.msra.mxu0 %v1338
        %1383 = vmatprep.subr.bf16.mxu0 0
        %1384 = vmatpush2.bf16.msra.mxu0 0
        %1385 = vmatprep.subr.bf16.mxu0 0
        %1386 = vmatpush2.bf16.msra.mxu0 0
        %1387 = vmatprep.subr.bf16.mxu0 0
        %1388 = vmatpush2.bf16.msra.mxu0 0
        %1389 = vmatprep.subr.bf16.mxu0 0
        %1390 = vmatpush2.bf16.msra.mxu0 0
        %1391 = vmatprep.subr.bf16.mxu0 0
        %1392 = vmatpush2.bf16.msra.mxu0 0
        %1393 = vmatprep.subr.bf16.mxu0 0
        %1394 = vmatpush2.bf16.msra.mxu0 0
        %1395 = vmatprep.subr.bf16.mxu0 0
        %1396 = vmatpush2.bf16.msra.mxu0 0
        %1397 = vmatprep.subr.bf16.mxu0 0
        %1398 = vmatpush2.bf16.msra.mxu0 0
        %1399 = vmatprep.mubr.bf16.mxu0 0
        %1400 = vmatmul.mubr.bf16.gmra.mxu0 %v1344
        %v1401 = vpop.f32.mrf.mxu0
        %v1402 = vadd.f32 0.0, %v1401
        %v1403 = vpop.f32.mrf.mxu0
        %v1404 = vpop.f32.mrf.mxu0
        %v1405 = vadd.f32 0.0, %v1404
        %v1406 = vpop.f32.mrf.mxu0
        %1407 = vmatprep.mubr.bf16.mxu0 0
        %1408 = vmatmul.mubr.bf16.gmra.mxu0 %v1347
        %v1409 = vpop.f32.mrf.mxu0
        %v1410 = vadd.f32 0.0, %v1409
        %v1411 = vpop.f32.mrf.mxu0
        %v1412 = vpop.f32.mrf.mxu0
        %v1413 = vadd.f32 0.0, %v1412
        %v1414 = vpop.f32.mrf.mxu0
        %1415 = vmatprep.mubr.bf16.mxu0 0
        %1416 = vmatmul.mubr.bf16.gmra.mxu0 %v1350
        %v1417 = vpop.f32.mrf.mxu0
        %v1418 = vadd.f32 0.0, %v1417
        %v1419 = vpop.f32.mrf.mxu0
        %v1420 = vpop.f32.mrf.mxu0
        %v1421 = vadd.f32 0.0, %v1420
        %v1422 = vpop.f32.mrf.mxu0
        %1423 = vmatprep.mubr.bf16.mxu0 0
        %1424 = vmatmul.mubr.bf16.gmra.mxu0 %v1353
        %v1425 = vpop.f32.mrf.mxu0
        %v1426 = vadd.f32 0.0, %v1425
        %v1427 = vpop.f32.mrf.mxu0
        %v1428 = vpop.f32.mrf.mxu0
        %v1429 = vadd.f32 0.0, %v1428
        %v1430 = vpop.f32.mrf.mxu0
        %1431 = vmatprep.mubr.bf16.mxu0 0
        %1432 = vmatmul.mubr.bf16.gmra.mxu0 %v1356
        %v1433 = vpop.f32.mrf.mxu0
        %v1434 = vadd.f32 0.0, %v1433
        %v1435 = vpop.f32.mrf.mxu0
        %v1436 = vpop.f32.mrf.mxu0
        %v1437 = vadd.f32 0.0, %v1436
        %v1438 = vpop.f32.mrf.mxu0
        %1439 = vmatprep.mubr.bf16.mxu0 0
        %1440 = vmatmul.mubr.bf16.gmra.mxu0 %v1359
        %v1441 = vpop.f32.mrf.mxu0
        %v1442 = vadd.f32 0.0, %v1441
        %v1443 = vpop.f32.mrf.mxu0
        %v1444 = vpop.f32.mrf.mxu0
        %v1445 = vadd.f32 0.0, %v1444
        %v1446 = vpop.f32.mrf.mxu0
        %1447 = vmatprep.mubr.bf16.mxu0 0
        %1448 = vmatmul.mubr.bf16.gmra.mxu0 %v1362
        %v1449 = vpop.f32.mrf.mxu0
        %v1450 = vadd.f32 0.0, %v1449
        %v1451 = vpop.f32.mrf.mxu0
        %v1452 = vpop.f32.mrf.mxu0
        %v1453 = vadd.f32 0.0, %v1452
        %v1454 = vpop.f32.mrf.mxu0
        %1455 = vmatprep.mubr.bf16.mxu0 0
        %1456 = vmatmul.mubr.bf16.gmra.mxu0 %v1365
        %v1457 = vpop.f32.mrf.mxu0
        %v1458 = vadd.f32 0.0, %v1457
        %v1459 = vpop.f32.mrf.mxu0
        %v1460 = vpop.f32.mrf.mxu0
        %v1461 = vadd.f32 0.0, %v1460
        %v1462 = vpop.f32.mrf.mxu0
        %1463 = vdwg.mxu0
        %v1465 = vsel %vm1342, %v1274, 0
        %v1468 = vsel %vm1342, %v1275, 0
        %v1471 = vsel %vm1342, %v1276, 0
        %v1474 = vsel %vm1342, %v1277, 0
        %v1477 = vsel %vm1342, %v1278, 0
        %v1480 = vsel %vm1342, %v1279, 0
        %v1483 = vsel %vm1342, %v1280, 0
        %v1486 = vsel %vm1342, %v1281, 0
        %1488 = vmatprep.subr.bf16.mxu0 0
        %1489 = vmatpush1.bf16.msra.mxu0 0
        %1490 = vmatprep.subr.bf16.mxu0 0
        %1491 = vmatpush1.bf16.msra.mxu0 0
        %1492 = vmatprep.subr.bf16.mxu0 0
        %1493 = vmatpush1.bf16.msra.mxu0 0
        %1494 = vmatprep.subr.bf16.mxu0 0
        %1495 = vmatpush1.bf16.msra.mxu0 0
        %1496 = vmatprep.subr.bf16.mxu0 0
        %1497 = vmatpush1.bf16.msra.mxu0 0
        %1498 = vmatprep.subr.bf16.mxu0 0
        %1499 = vmatpush1.bf16.msra.mxu0 0
        %1500 = vmatprep.subr.bf16.mxu0 0
        %1501 = vmatpush1.bf16.msra.mxu0 %v1339
        %1502 = vmatprep.subr.bf16.mxu0 0
        %1503 = vmatpush1.bf16.msra.mxu0 %v1338
        %1504 = vmatprep.subr.bf16.mxu0 0
        %1505 = vmatpush2.bf16.msra.mxu0 0
        %1506 = vmatprep.subr.bf16.mxu0 0
        %1507 = vmatpush2.bf16.msra.mxu0 0
        %1508 = vmatprep.subr.bf16.mxu0 0
        %1509 = vmatpush2.bf16.msra.mxu0 0
        %1510 = vmatprep.subr.bf16.mxu0 0
        %1511 = vmatpush2.bf16.msra.mxu0 0
        %1512 = vmatprep.subr.bf16.mxu0 0
        %1513 = vmatpush2.bf16.msra.mxu0 0
        %1514 = vmatprep.subr.bf16.mxu0 0
        %1515 = vmatpush2.bf16.msra.mxu0 0
        %1516 = vmatprep.subr.bf16.mxu0 0
        %1517 = vmatpush2.bf16.msra.mxu0 0
        %1518 = vmatprep.subr.bf16.mxu0 0
        %1519 = vmatpush2.bf16.msra.mxu0 0
        %1520 = vmatprep.mubr.bf16.mxu0 0
        %1521 = vmatmul.mubr.bf16.gmra.mxu0 %v1465
        %v1522 = vpop.f32.mrf.mxu0
        %v1523 = vadd.f32 %v1402, %v1522
        %v1524 = vpop.f32.mrf.mxu0
        %v1525 = vpop.f32.mrf.mxu0
        %v1526 = vadd.f32 %v1405, %v1525
        %v1527 = vpop.f32.mrf.mxu0
        %1528 = vmatprep.mubr.bf16.mxu0 0
        %1529 = vmatmul.mubr.bf16.gmra.mxu0 %v1468
        %v1530 = vpop.f32.mrf.mxu0
        %v1531 = vadd.f32 %v1410, %v1530
        %v1532 = vpop.f32.mrf.mxu0
        %v1533 = vpop.f32.mrf.mxu0
        %v1534 = vadd.f32 %v1413, %v1533
        %v1535 = vpop.f32.mrf.mxu0
        %1536 = vmatprep.mubr.bf16.mxu0 0
        %1537 = vmatmul.mubr.bf16.gmra.mxu0 %v1471
        %v1538 = vpop.f32.mrf.mxu0
        %v1539 = vadd.f32 %v1418, %v1538
        %v1540 = vpop.f32.mrf.mxu0
        %v1541 = vpop.f32.mrf.mxu0
        %v1542 = vadd.f32 %v1421, %v1541
        %v1543 = vpop.f32.mrf.mxu0
        %1544 = vmatprep.mubr.bf16.mxu0 0
        %1545 = vmatmul.mubr.bf16.gmra.mxu0 %v1474
        %v1546 = vpop.f32.mrf.mxu0
        %v1547 = vadd.f32 %v1426, %v1546
        %v1548 = vpop.f32.mrf.mxu0
        %v1549 = vpop.f32.mrf.mxu0
        %v1550 = vadd.f32 %v1429, %v1549
        %v1551 = vpop.f32.mrf.mxu0
        %1552 = vmatprep.mubr.bf16.mxu0 0
        %1553 = vmatmul.mubr.bf16.gmra.mxu0 %v1477
        %v1554 = vpop.f32.mrf.mxu0
        %v1555 = vadd.f32 %v1434, %v1554
        %v1556 = vpop.f32.mrf.mxu0
        %v1557 = vpop.f32.mrf.mxu0
        %v1558 = vadd.f32 %v1437, %v1557
        %v1559 = vpop.f32.mrf.mxu0
        %1560 = vmatprep.mubr.bf16.mxu0 0
        %1561 = vmatmul.mubr.bf16.gmra.mxu0 %v1480
        %v1562 = vpop.f32.mrf.mxu0
        %v1563 = vadd.f32 %v1442, %v1562
        %v1564 = vpop.f32.mrf.mxu0
        %v1565 = vpop.f32.mrf.mxu0
        %v1566 = vadd.f32 %v1445, %v1565
        %v1567 = vpop.f32.mrf.mxu0
        %1568 = vmatprep.mubr.bf16.mxu0 0
        %1569 = vmatmul.mubr.bf16.gmra.mxu0 %v1483
        %v1570 = vpop.f32.mrf.mxu0
        %v1571 = vadd.f32 %v1450, %v1570
        %v1572 = vpop.f32.mrf.mxu0
        %v1573 = vpop.f32.mrf.mxu0
        %v1574 = vadd.f32 %v1453, %v1573
        %v1575 = vpop.f32.mrf.mxu0
        %1576 = vmatprep.mubr.bf16.mxu0 0
        %1577 = vmatmul.mubr.bf16.gmra.mxu0 %v1486
        %v1578 = vpop.f32.mrf.mxu0
        %v1579 = vadd.f32 %v1458, %v1578
        %v1580 = vpop.f32.mrf.mxu0
        %v1581 = vpop.f32.mrf.mxu0
        %v1582 = vadd.f32 %v1461, %v1581
        %v1583 = vpop.f32.mrf.mxu0
        %1584 = vdwg.mxu0
        %v1589 = vunpack.c.l.b16 %v1326
        %v1590 = vunpack.c.l.b16 %v1327
        %v1591 = vunpack.c.l.b16 %v1328
        %v1592 = vunpack.c.l.b16 %v1329
        %v1593 = vpack.c.b16 %v1590, %v1589
        %v1594 = vpack.c.b16 %v1592, %v1591
        %1597 = vmatprep.subr.bf16.mxu0 0
        %1598 = vmatpush1.bf16.msra.mxu0 0
        %1599 = vmatprep.subr.bf16.mxu0 0
        %1600 = vmatpush1.bf16.msra.mxu0 0
        %1601 = vmatprep.subr.bf16.mxu0 0
        %1602 = vmatpush1.bf16.msra.mxu0 0
        %1603 = vmatprep.subr.bf16.mxu0 0
        %1604 = vmatpush1.bf16.msra.mxu0 0
        %1605 = vmatprep.subr.bf16.mxu0 0
        %1606 = vmatpush1.bf16.msra.mxu0 0
        %1607 = vmatprep.subr.bf16.mxu0 0
        %1608 = vmatpush1.bf16.msra.mxu0 0
        %1609 = vmatprep.subr.bf16.mxu0 0
        %1610 = vmatpush1.bf16.msra.mxu0 %v1594
        %1611 = vmatprep.subr.bf16.mxu0 0
        %1612 = vmatpush1.bf16.msra.mxu0 %v1593
        %1613 = vmatprep.subr.bf16.mxu0 0
        %1614 = vmatpush2.bf16.msra.mxu0 0
        %1615 = vmatprep.subr.bf16.mxu0 0
        %1616 = vmatpush2.bf16.msra.mxu0 0
        %1617 = vmatprep.subr.bf16.mxu0 0
        %1618 = vmatpush2.bf16.msra.mxu0 0
        %1619 = vmatprep.subr.bf16.mxu0 0
        %1620 = vmatpush2.bf16.msra.mxu0 0
        %1621 = vmatprep.subr.bf16.mxu0 0
        %1622 = vmatpush2.bf16.msra.mxu0 0
        %1623 = vmatprep.subr.bf16.mxu0 0
        %1624 = vmatpush2.bf16.msra.mxu0 0
        %1625 = vmatprep.subr.bf16.mxu0 0
        %1626 = vmatpush2.bf16.msra.mxu0 0
        %1627 = vmatprep.subr.bf16.mxu0 0
        %1628 = vmatpush2.bf16.msra.mxu0 0
        %1629 = vmatprep.mubr.bf16.mxu0 0
        %1630 = vmatmul.mubr.bf16.gmra.mxu0 %v1465
        %v1631 = vpop.f32.mrf.mxu0
        %v1632 = vadd.f32 0.0, %v1631
        %v1633 = vpop.f32.mrf.mxu0
        %v1634 = vpop.f32.mrf.mxu0
        %v1635 = vadd.f32 0.0, %v1634
        %v1636 = vpop.f32.mrf.mxu0
        %1637 = vmatprep.mubr.bf16.mxu0 0
        %1638 = vmatmul.mubr.bf16.gmra.mxu0 %v1468
        %v1639 = vpop.f32.mrf.mxu0
        %v1640 = vadd.f32 0.0, %v1639
        %v1641 = vpop.f32.mrf.mxu0
        %v1642 = vpop.f32.mrf.mxu0
        %v1643 = vadd.f32 0.0, %v1642
        %v1644 = vpop.f32.mrf.mxu0
        %1645 = vmatprep.mubr.bf16.mxu0 0
        %1646 = vmatmul.mubr.bf16.gmra.mxu0 %v1471
        %v1647 = vpop.f32.mrf.mxu0
        %v1648 = vadd.f32 0.0, %v1647
        %v1649 = vpop.f32.mrf.mxu0
        %v1650 = vpop.f32.mrf.mxu0
        %v1651 = vadd.f32 0.0, %v1650
        %v1652 = vpop.f32.mrf.mxu0
        %1653 = vmatprep.mubr.bf16.mxu0 0
        %1654 = vmatmul.mubr.bf16.gmra.mxu0 %v1474
        %v1655 = vpop.f32.mrf.mxu0
        %v1656 = vadd.f32 0.0, %v1655
        %v1657 = vpop.f32.mrf.mxu0
        %v1658 = vpop.f32.mrf.mxu0
        %v1659 = vadd.f32 0.0, %v1658
        %v1660 = vpop.f32.mrf.mxu0
        %1661 = vmatprep.mubr.bf16.mxu0 0
        %1662 = vmatmul.mubr.bf16.gmra.mxu0 %v1477
        %v1663 = vpop.f32.mrf.mxu0
        %v1664 = vadd.f32 0.0, %v1663
        %v1665 = vpop.f32.mrf.mxu0
        %v1666 = vpop.f32.mrf.mxu0
        %v1667 = vadd.f32 0.0, %v1666
        %v1668 = vpop.f32.mrf.mxu0
        %1669 = vmatprep.mubr.bf16.mxu0 0
        %1670 = vmatmul.mubr.bf16.gmra.mxu0 %v1480
        %v1671 = vpop.f32.mrf.mxu0
        %v1672 = vadd.f32 0.0, %v1671
        %v1673 = vpop.f32.mrf.mxu0
        %v1674 = vpop.f32.mrf.mxu0
        %v1675 = vadd.f32 0.0, %v1674
        %v1676 = vpop.f32.mrf.mxu0
        %1677 = vmatprep.mubr.bf16.mxu0 0
        %1678 = vmatmul.mubr.bf16.gmra.mxu0 %v1483
        %v1679 = vpop.f32.mrf.mxu0
        %v1680 = vadd.f32 0.0, %v1679
        %v1681 = vpop.f32.mrf.mxu0
        %v1682 = vpop.f32.mrf.mxu0
        %v1683 = vadd.f32 0.0, %v1682
        %v1684 = vpop.f32.mrf.mxu0
        %1685 = vmatprep.mubr.bf16.mxu0 0
        %1686 = vmatmul.mubr.bf16.gmra.mxu0 %v1486
        %v1687 = vpop.f32.mrf.mxu0
        %v1688 = vadd.f32 0.0, %v1687
        %v1689 = vpop.f32.mrf.mxu0
        %v1690 = vpop.f32.mrf.mxu0
        %v1691 = vadd.f32 0.0, %v1690
        %v1692 = vpop.f32.mrf.mxu0
        %1693 = vdwg.mxu0
        %v1694 = vadd.f32 %v1523, %v1632
        %v1695 = vadd.f32 %v1526, %v1635
        %v1696 = vadd.f32 %v1531, %v1640
        %v1697 = vadd.f32 %v1534, %v1643
        %v1698 = vadd.f32 %v1539, %v1648
        %v1699 = vadd.f32 %v1542, %v1651
        %v1700 = vadd.f32 %v1547, %v1656
        %v1701 = vadd.f32 %v1550, %v1659
        %v1702 = vadd.f32 %v1555, %v1664
        %v1703 = vadd.f32 %v1558, %v1667
        %v1704 = vadd.f32 %v1563, %v1672
        %v1705 = vadd.f32 %v1566, %v1675
        %v1706 = vadd.f32 %v1571, %v1680
        %v1707 = vadd.f32 %v1574, %v1683
        %v1708 = vadd.f32 %v1579, %v1688
        %v1709 = vadd.f32 %v1582, %v1691
        %v1710 = vld [vmem:[%s5] sm:$0x1]
        %v1712 = vlaneseq
        %v1713 = vshrl.u32 %v1712, 7
        %v1714 = vsub.s32 0, %v1713
        %v1715 = vrot.slane %v1710, %v1714
        %v1717 = vadd.f32 %v1694, %v1715
        %v1718 = vadd.f32 %v1695, %v1715
        %v1719 = vadd.f32 %v1696, %v1715
        %v1720 = vadd.f32 %v1697, %v1715
        %v1721 = vadd.f32 %v1698, %v1715
        %v1722 = vadd.f32 %v1699, %v1715
        %v1723 = vadd.f32 %v1700, %v1715
        %v1724 = vadd.f32 %v1701, %v1715
        %v1725 = vadd.f32 %v1702, %v1715
        %v1726 = vadd.f32 %v1703, %v1715
        %v1727 = vadd.f32 %v1704, %v1715
        %v1728 = vadd.f32 %v1705, %v1715
        %v1729 = vadd.f32 %v1706, %v1715
        %v1730 = vadd.f32 %v1707, %v1715
        %v1731 = vadd.f32 %v1708, %v1715
        %v1732 = vadd.f32 %v1709, %v1715
        %1733 = vst [vmem:[%s245] sm:$0xff] %v1717
        %1734 = vst [vmem:[%s245 + $0x8] sm:$0xff] %v1718
        %1735 = vst [vmem:[%s245 + $0x10] sm:$0xff] %v1719
        %1736 = vst [vmem:[%s245 + $0x18] sm:$0xff] %v1720
        %1737 = vst [vmem:[%s245 + $0x20] sm:$0xff] %v1721
        %1738 = vst [vmem:[%s245 + $0x28] sm:$0xff] %v1722
        %1739 = vst [vmem:[%s245 + $0x30] sm:$0xff] %v1723
        %1740 = vst [vmem:[%s245 + $0x38] sm:$0xff] %v1724
        %1741 = vst [vmem:[%s245 + $0x40] sm:$0xff] %v1725
        %1742 = vst [vmem:[%s245 + $0x48] sm:$0xff] %v1726
        %1743 = vst [vmem:[%s245 + $0x50] sm:$0xff] %v1727
        %1744 = vst [vmem:[%s245 + $0x58] sm:$0xff] %v1728
        %1745 = vst [vmem:[%s245 + $0x60] sm:$0xff] %v1729
        %1746 = vst [vmem:[%s245 + $0x68] sm:$0xff] %v1730
        %1747 = vst [vmem:[%s245 + $0x70] sm:$0xff] %v1731
        %1748 = vst [vmem:[%s245 + $0x78] sm:$0xff] %v1732
        %s1749 = sand.u32 %s159, 1
        %s1750 = scalar_lea.sflag [#allocation3], %s1749
        %s1751 = sand.u32 %s159, 1
        %s1752 = smul.addr %s1751, 128
        %s1753 = scalar_lea.vmem [#allocation2], %s1752
        // Predicated region
        $region45: #{tpu_custom_call.1} parent=43 // pred_check
          %p1754 = pneg %p169
        $region46: #{tpu_custom_call.1} parent=43 // pred_check_branch
          %1756 = sbr.rel (%p1754) target = $region48
        $region47: #{tpu_custom_call.1} parent=43 // pred_region
          %s1757 = smul.u32 16, %s20
          %s1759 = ssub.s32 2048, 2048
          %1760 = vsyncadd %s1750, %s1759
          %s1761 = smul.addr %s1757, 128
          %s1762 = scalar_lea.hbm %s6, %s1761
          %s1763 = sshll.u32 %s1753, 4
          %s1764 = int_to_ptr.vmem [resolvable:$true] %s1763
          %1769 = dma.vmem_to_hbm [thread:$0]  %s1764, 2048, %s1762, %s1750, 128, 128, 8
        $region48: #{tpu_custom_call.1} parent=43 // pred_fallthru
          _
      $region44: #{tpu_custom_call.1} parent=5 // pred_fallthru
        _
      %p1770 = scmp.le.s32.totalorder 2, %s15
      // Predicated region
      $region49: #{tpu_custom_call.1} parent=5 // pred_check
        %p1771 = pneg %p1770
      $region50: #{tpu_custom_call.1} parent=5 // pred_check_branch
        %1773 = sbr.rel (%p1771) target = $region52
      $region51: #{tpu_custom_call.1} parent=5 // pred_region
        %s1774 = ssub.s32 %s15, 2
        // Predicated region
        $region53: #{tpu_custom_call.1} parent=51 // pred_check
          %p1775 = pneg %p175
        $region54: #{tpu_custom_call.1} parent=51 // pred_check_branch
          %1777 = sbr.rel (%p1775) target = $region56
        $region55: #{tpu_custom_call.1} parent=51 // pred_region
          %s1778 = sand.u32 %s160, 1
          %s1779 = scalar_lea.sflag [#allocation3], %s1778
          %s1780 = sand.u32 %s160, 1
          %s1781 = smul.addr %s1780, 128
          %s1782 = scalar_lea.vmem [#allocation2], %s1781
          %1783 = dma.done %s1779, 2048
        $region56: #{tpu_custom_call.1} parent=51 // pred_fallthru
          _
      $region52: #{tpu_custom_call.1} parent=5 // pred_fallthru
        _
    $region6: #{tpu_custom_call.1} parent=1 // loop_footer
      %s19 = sadd.s32 1, %s15
    $region7: #{tpu_custom_call.1} parent=1 // loop_footer_branch
      %14 = sbr.rel target = $region3
    $region8: #{tpu_custom_call.1} parent=1 // loop_exit
      _
    %1784 = vsyncpa [#allocation3], 1
    %s1785 = scalar_lea.sflag [#allocation3], 1
    %1786 = vsyncpa %s1785, 1

</llo_original>
